<compile_context>
chip_gen: v7x
topology: tpu7x:2x2x1
jax: 0.10.0
libtpu: 0.0.40
codegen_flags: <defaults>
</compile_context>

<pallas_src>
import functools

import jax
import jax.numpy as jnp
from jax.experimental import pallas as pl
from jax.experimental.pallas import tpu as pltpu


# ---------------------------------------------------------------------------
# Fused Pallas kernel
# ---------------------------------------------------------------------------

def _shift_left_lanes(y, d):
    """Rotate a 2-D array left by d along the lane axis (contiguous slices + concat)."""
    return jnp.concatenate([y[:, d:], y[:, :d]], axis=1)


def _cnn_light_kernel(*refs, num_layers):
    """Entire CNN_Light forward (eval mode) for the whole (small) batch, in VMEM.

    refs layout:
      x                      (N, L0)              VMEM f32
      (w_i, b_i)*num_layers  (Cout, Cin*K),(Cout,) SMEM f32   BN-folded conv params
      wm1, bm1, wm2, bm2, wm3, bm3                 VMEM f32   MLP params (wm1 is "dilated")
      out                    (N, 1)               VMEM f32

    Invariant: activations are a python list of per-channel (N, L0) arrays whose valid
    samples sit at lane stride d = 2**block_index (dilated maxpool layout).  Lanes that
    are not multiples of d hold dead values that are never read at valid positions and
    are cancelled by zero rows of wm1 at the flatten step.
    """
    it = iter(refs)
    x_ref = next(it)
    conv_params = [(next(it), next(it)) for _ in range(num_layers)]
    wm1_ref, bm1_ref, wm2_ref, bm2_ref, wm3_ref, bm3_ref = (next(it) for _ in range(6))
    o_ref = next(it)

    n, l0 = x_ref.shape
    acts = [x_ref[...]]            # block 0 input: single channel, (N, L0)
    d = 1                          # current lane dilation of valid samples
    for w_ref, b_ref in conv_params:
        c_out = w_ref.shape[0]
        c_in = len(acts)
        k_sz = w_ref.shape[1] // c_in
        padk = (k_sz - 1) // 2

        # In-kernel zero padding (dilated by d) for the "same" convolution.
        zpad = jnp.zeros((n, d * padk), jnp.float32)
        xp = [jnp.concatenate([zpad, a, zpad], axis=1) for a in acts]

        new_acts = []
        for o in range(c_out):
            # Conv1d (+ folded BN bias) as shifted scalar multiply-adds on the VPU.
            acc = jnp.full((n, l0), b_ref[o], jnp.float32)
            for c in range(c_in):
                for k in range(k_sz):
                    acc = acc + w_ref[o, c * k_sz + k] * xp[c][:, d * k:d * k + l0]
            y = jnp.maximum(acc, 0.0)                        # ReLU
            # MaxPool1d(2, 2): pair-max with the d-shifted copy; results land on lanes
            # that are multiples of 2*d (other lanes are dead and never consumed).
            new_acts.append(jnp.maximum(y, _shift_left_lanes(y, d)))
        acts = new_acts
        d *= 2

    # Flatten (dilated layout) -> Linear -> Dropout(identity in eval) -> Linear -> Linear.
    feat = jnp.concatenate(acts, axis=1)                     # (N, C * L0), dead lanes * 0-rows
    h = jnp.dot(feat, wm1_ref[...], preferred_element_type=jnp.float32) + bm1_ref[...]
    h = jnp.dot(h, wm2_ref[...], preferred_element_type=jnp.float32) + bm2_ref[...]
    o_ref[...] = jnp.dot(h, wm3_ref[...], preferred_element_type=jnp.float32) + bm3_ref[...]


# ---------------------------------------------------------------------------
# Wrapper: BN folding, weight re-layout, single pallas_call
# ---------------------------------------------------------------------------

_VMEM = pl.BlockSpec(memory_space=pltpu.MemorySpace.VMEM)
_SMEM = pl.BlockSpec(memory_space=pltpu.MemorySpace.SMEM)


def cnn_light_forward(x, params, *, eps=1e-5):
    """x: (N, 1, L).  params in PyTorch layouts (see init_params).  Returns (N, 1)."""
    n, c0, l0 = x.shape
    assert c0 == 1
    blocks = params['blocks']
    num_layers = len(blocks)
    channel = blocks[0]['w'].shape[0]

    inputs = [x[:, 0, :]]          # (N, L0): batch on sublanes, length on lanes
    in_specs = [_VMEM]

    # Fold eval-mode BatchNorm into each conv's weight/bias (trace-time constant fold).
    for blk in blocks:
        scale = blk['gamma'] * jax.lax.rsqrt(blk['var'] + eps)             # (c_out,)
        wf = (blk['w'] * scale[:, None, None]).reshape(blk['w'].shape[0], -1)  # (c_out, c_in*K)
        bf = (blk['b'] - blk['mean']) * scale + blk['beta']                 # (c_out,)
        inputs += [wf, bf]
        in_specs += [_SMEM, _SMEM]

    # First Linear: re-layout to the kernel's dilated/flattened feature space.
    # Valid feature (c, l) lives at kernel column c*L0 + df*l; every other row is zero,
    # so the dead lanes of the dilated activations contribute nothing.
    df = 2 ** num_layers
    lf = l0 // df
    num_neu = params['w1'].shape[0]                       # PyTorch layout (out, in)
    w1_t = params['w1'].T.astype(jnp.float32)             # (channel*lf, num_neu), (c,l) order
    rows = (jnp.arange(channel)[:, None] * l0 + df * jnp.arange(lf)[None, :]).reshape(-1)
    w1_dil = jnp.zeros((channel * l0, num_neu), jnp.float32).at[rows].set(w1_t)

    inputs += [w1_dil, params['b1'].reshape(1, -1),
               params['w2'].T, params['b2'].reshape(1, -1),
               params['w3'].T, params['b3'].reshape(1, -1)]
    in_specs += [_VMEM] * 6

    kernel = functools.partial(_cnn_light_kernel, num_layers=num_layers)
    # NOTE: batch is tiny (N=2) so the whole batch lives in VMEM in a single grid-less
    # invocation; for large N, tile the batch (sublane) axis with a "parallel" grid.
    return pl.pallas_call(
        kernel,
        out_shape=jax.ShapeDtypeStruct((n, 1), jnp.float32),
        in_specs=in_specs,
        out_specs=_VMEM,
    )(*inputs)


# ---------------------------------------------------------------------------
# Parameters (PyTorch layouts) and a pure-JAX reference for self-checking
# ---------------------------------------------------------------------------

def init_params(key, length, channel, num_layers, num_neu):
    """Deterministic params. PyTorch layouts: conv w (C_out,C_in,K), linear w (out,in)."""
    def nxt():
        nonlocal key
        key, sub = jax.random.split(key)
        return sub

    params = {'blocks': []}
    cur_len = length
    specs = [(1, channel, 7)] + [(channel, channel, 3)] * (num_layers - 1)
    for c_in, c_out, k in specs:
        params['blocks'].append({
            'w': 0.1 * jax.random.normal(nxt(), (c_out, c_in, k), jnp.float32),
            'b': 0.1 * jax.random.normal(nxt(), (c_out,), jnp.float32),
            'gamma': 1.0 + 0.1 * jax.random.normal(nxt(), (c_out,), jnp.float32),
            'beta': 0.1 * jax.random.normal(nxt(), (c_out,), jnp.float32),
            'mean': jnp.zeros((c_out,), jnp.float32),   # PyTorch BN running_mean init
            'var': jnp.ones((c_out,), jnp.float32),     # PyTorch BN running_var init
        })
        cur_len //= 2

    d_flat = cur_len * channel
    params['w1'] = 0.1 * jax.random.normal(nxt(), (num_neu, d_flat), jnp.float32)
    params['b1'] = 0.1 * jax.random.normal(nxt(), (num_neu,), jnp.float32)
    params['w2'] = 0.1 * jax.random.normal(nxt(), (num_neu, num_neu), jnp.float32)
    params['b2'] = 0.1 * jax.random.normal(nxt(), (num_neu,), jnp.float32)
    params['w3'] = 0.1 * jax.random.normal(nxt(), (1, num_neu), jnp.float32)
    params['b3'] = 0.1 * jax.random.normal(nxt(), (1,), jnp.float32)
    return params


def reference_forward(x, params, *, eps=1e-5):
    """Plain-XLA reference mirroring the PyTorch module in eval mode."""
    hi = jax.lax.Precision.HIGHEST
    h = x
    for blk in params['blocks']:
        w, b = blk['w'], blk['b']
        k_sz = w.shape[2]
        pad = (k_sz - 1) // 2
        n, _, L = h.shape
        hp = jnp.pad(h, ((0, 0), (0, 0), (pad, pad)))
        y = jnp.zeros((n, w.shape[0], L), jnp.float32)
        for k in range(k_sz):
            y = y + jnp.einsum('oc,ncl->nol', w[:, :, k], hp[:, :, k:k + L], precision=hi)
        y = y + b[None, :, None]
        scale = blk['gamma'] * jax.lax.rsqrt(blk['var'] + eps)
        y = (y - blk['mean'][None, :, None]) * scale[None, :, None] + blk['beta'][None, :, None]
        y = jnp.maximum(y, 0.0)
        y = jnp.max(y.reshape(n, w.shape[0], L // 2, 2), axis=-1)
        h = y
    f = h.reshape(h.shape[0], -1)
    h1 = jnp.dot(f, params['w1'].T, precision=hi) + params['b1']
    h2 = jnp.dot(h1, params['w2'].T, precision=hi) + params['b2']
    return jnp.dot(h2, params['w3'].T, precision=hi) + params['b3']


# ---------------------------------------------------------------------------
# Main
# ---------------------------------------------------------------------------

if __name__ == "__main__":
    # CNN_Light(length=16, channel=4, num_layers=2, num_neu=32, pdrop=0.1), batch=2.
    length, channel, num_layers, num_neu = 16, 4, 2, 32
    batch = 2

    key = jax.random.PRNGKey(0)
    key, xkey = jax.random.split(key)
    x = jax.random.normal(xkey, (batch, 1, length), jnp.float32)   # (N, C=1, L)
    params = init_params(key, length, channel, num_layers, num_neu)

    out = jax.jit(cnn_light_forward)(x, params)
    out = jax.block_until_ready(out)
    assert out.shape == (batch, 1), out.shape

    ref = reference_forward(x, params)
    assert jnp.allclose(out, ref, rtol=2e-3, atol=2e-3), (out, ref)

    print("KERNEL_OK")
</pallas_src>

<mosaic_0001>
module attributes {stable_mosaic.version = 11 : i64} {
  func.func @_cnn_light_kernel(%arg0: memref<2x16xf32, #tpu.memory_space<vmem>>, %arg1: memref<4x7xf32, #tpu.memory_space<smem>>, %arg2: memref<4xf32, #tpu.memory_space<smem>>, %arg3: memref<4x12xf32, #tpu.memory_space<smem>>, %arg4: memref<4xf32, #tpu.memory_space<smem>>, %arg5: memref<64x32xf32, #tpu.memory_space<vmem>>, %arg6: memref<1x32xf32, #tpu.memory_space<vmem>>, %arg7: memref<32x32xf32, #tpu.memory_space<vmem>>, %arg8: memref<1x32xf32, #tpu.memory_space<vmem>>, %arg9: memref<32x1xf32, #tpu.memory_space<vmem>>, %arg10: memref<1x1xf32, #tpu.memory_space<vmem>>, %arg11: memref<2x1xf32, #tpu.memory_space<vmem>>) attributes {dimension_semantics = [], scalar_prefetch = 0 : i64, scratch_operands = 0 : i64, tpu.core_type = #tpu.core_type<tc>} {
    %c0 = arith.constant 0 : index
    %c0_0 = arith.constant 0 : index
    %0 = vector.load %arg0[%c0, %c0_0] : memref<2x16xf32, #tpu.memory_space<vmem>>, vector<2x16xf32>
    %cst = arith.constant 0.000000e+00 : f32
    %1 = vector.broadcast %cst : f32 to vector<2x3xf32>
    %2 = tpu.concatenate %1, %0, %1 in 1 : vector<2x3xf32>, vector<2x16xf32>, vector<2x3xf32> -> vector<2x22xf32>
    %c0_1 = arith.constant 0 : index
    %3 = memref.load %arg2[%c0_1] : memref<4xf32, #tpu.memory_space<smem>>
    %4 = vector.broadcast %3 : f32 to vector<2x16xf32>
    %c0_2 = arith.constant 0 : index
    %c0_3 = arith.constant 0 : index
    %5 = memref.load %arg1[%c0_2, %c0_3] : memref<4x7xf32, #tpu.memory_space<smem>>
    %6 = vector.extract_strided_slice %2 {offsets = [0, 0], sizes = [2, 16], strides = [1, 1]} : vector<2x22xf32> to vector<2x16xf32>
    %7 = vector.broadcast %5 : f32 to vector<2x16xf32>
    %8 = arith.mulf %7, %6 : vector<2x16xf32>
    %9 = arith.addf %4, %8 : vector<2x16xf32>
    %c0_4 = arith.constant 0 : index
    %c1 = arith.constant 1 : index
    %10 = memref.load %arg1[%c0_4, %c1] : memref<4x7xf32, #tpu.memory_space<smem>>
    %11 = vector.extract_strided_slice %2 {offsets = [0, 1], sizes = [2, 16], strides = [1, 1]} : vector<2x22xf32> to vector<2x16xf32>
    %12 = vector.broadcast %10 : f32 to vector<2x16xf32>
    %13 = arith.mulf %12, %11 : vector<2x16xf32>
    %14 = arith.addf %9, %13 : vector<2x16xf32>
    %c0_5 = arith.constant 0 : index
    %c2 = arith.constant 2 : index
    %15 = memref.load %arg1[%c0_5, %c2] : memref<4x7xf32, #tpu.memory_space<smem>>
    %16 = vector.extract_strided_slice %2 {offsets = [0, 2], sizes = [2, 16], strides = [1, 1]} : vector<2x22xf32> to vector<2x16xf32>
    %17 = vector.broadcast %15 : f32 to vector<2x16xf32>
    %18 = arith.mulf %17, %16 : vector<2x16xf32>
    %19 = arith.addf %14, %18 : vector<2x16xf32>
    %c0_6 = arith.constant 0 : index
    %c3 = arith.constant 3 : index
    %20 = memref.load %arg1[%c0_6, %c3] : memref<4x7xf32, #tpu.memory_space<smem>>
    %21 = vector.extract_strided_slice %2 {offsets = [0, 3], sizes = [2, 16], strides = [1, 1]} : vector<2x22xf32> to vector<2x16xf32>
    %22 = vector.broadcast %20 : f32 to vector<2x16xf32>
    %23 = arith.mulf %22, %21 : vector<2x16xf32>
    %24 = arith.addf %19, %23 : vector<2x16xf32>
    %c0_7 = arith.constant 0 : index
    %c4 = arith.constant 4 : index
    %25 = memref.load %arg1[%c0_7, %c4] : memref<4x7xf32, #tpu.memory_space<smem>>
    %26 = vector.extract_strided_slice %2 {offsets = [0, 4], sizes = [2, 16], strides = [1, 1]} : vector<2x22xf32> to vector<2x16xf32>
    %27 = vector.broadcast %25 : f32 to vector<2x16xf32>
    %28 = arith.mulf %27, %26 : vector<2x16xf32>
    %29 = arith.addf %24, %28 : vector<2x16xf32>
    %c0_8 = arith.constant 0 : index
    %c5 = arith.constant 5 : index
    %30 = memref.load %arg1[%c0_8, %c5] : memref<4x7xf32, #tpu.memory_space<smem>>
    %31 = vector.extract_strided_slice %2 {offsets = [0, 5], sizes = [2, 16], strides = [1, 1]} : vector<2x22xf32> to vector<2x16xf32>
    %32 = vector.broadcast %30 : f32 to vector<2x16xf32>
    %33 = arith.mulf %32, %31 : vector<2x16xf32>
    %34 = arith.addf %29, %33 : vector<2x16xf32>
    %c0_9 = arith.constant 0 : index
    %c6 = arith.constant 6 : index
    %35 = memref.load %arg1[%c0_9, %c6] : memref<4x7xf32, #tpu.memory_space<smem>>
    %36 = vector.extract_strided_slice %2 {offsets = [0, 6], sizes = [2, 16], strides = [1, 1]} : vector<2x22xf32> to vector<2x16xf32>
    %37 = vector.broadcast %35 : f32 to vector<2x16xf32>
    %38 = arith.mulf %37, %36 : vector<2x16xf32>
    %39 = arith.addf %34, %38 : vector<2x16xf32>
    %cst_10 = arith.constant 0.000000e+00 : f32
    %40 = vector.broadcast %cst_10 : f32 to vector<2x16xf32>
    %41 = arith.maximumf %39, %40 : vector<2x16xf32>
    %42 = vector.extract_strided_slice %41 {offsets = [0, 1], sizes = [2, 15], strides = [1, 1]} : vector<2x16xf32> to vector<2x15xf32>
    %43 = vector.extract_strided_slice %41 {offsets = [0, 0], sizes = [2, 1], strides = [1, 1]} : vector<2x16xf32> to vector<2x1xf32>
    %44 = tpu.concatenate %42, %43 in 1 : vector<2x15xf32>, vector<2x1xf32> -> vector<2x16xf32>
    %45 = arith.maximumf %41, %44 : vector<2x16xf32>
    %c1_11 = arith.constant 1 : index
    %46 = memref.load %arg2[%c1_11] : memref<4xf32, #tpu.memory_space<smem>>
    %47 = vector.broadcast %46 : f32 to vector<2x16xf32>
    %c1_12 = arith.constant 1 : index
    %c0_13 = arith.constant 0 : index
    %48 = memref.load %arg1[%c1_12, %c0_13] : memref<4x7xf32, #tpu.memory_space<smem>>
    %49 = vector.extract_strided_slice %2 {offsets = [0, 0], sizes = [2, 16], strides = [1, 1]} : vector<2x22xf32> to vector<2x16xf32>
    %50 = vector.broadcast %48 : f32 to vector<2x16xf32>
    %51 = arith.mulf %50, %49 : vector<2x16xf32>
    %52 = arith.addf %47, %51 : vector<2x16xf32>
    %c1_14 = arith.constant 1 : index
    %c1_15 = arith.constant 1 : index
    %53 = memref.load %arg1[%c1_14, %c1_15] : memref<4x7xf32, #tpu.memory_space<smem>>
    %54 = vector.extract_strided_slice %2 {offsets = [0, 1], sizes = [2, 16], strides = [1, 1]} : vector<2x22xf32> to vector<2x16xf32>
    %55 = vector.broadcast %53 : f32 to vector<2x16xf32>
    %56 = arith.mulf %55, %54 : vector<2x16xf32>
    %57 = arith.addf %52, %56 : vector<2x16xf32>
    %c1_16 = arith.constant 1 : index
    %c2_17 = arith.constant 2 : index
    %58 = memref.load %arg1[%c1_16, %c2_17] : memref<4x7xf32, #tpu.memory_space<smem>>
    %59 = vector.extract_strided_slice %2 {offsets = [0, 2], sizes = [2, 16], strides = [1, 1]} : vector<2x22xf32> to vector<2x16xf32>
    %60 = vector.broadcast %58 : f32 to vector<2x16xf32>
    %61 = arith.mulf %60, %59 : vector<2x16xf32>
    %62 = arith.addf %57, %61 : vector<2x16xf32>
    %c1_18 = arith.constant 1 : index
    %c3_19 = arith.constant 3 : index
    %63 = memref.load %arg1[%c1_18, %c3_19] : memref<4x7xf32, #tpu.memory_space<smem>>
    %64 = vector.extract_strided_slice %2 {offsets = [0, 3], sizes = [2, 16], strides = [1, 1]} : vector<2x22xf32> to vector<2x16xf32>
    %65 = vector.broadcast %63 : f32 to vector<2x16xf32>
    %66 = arith.mulf %65, %64 : vector<2x16xf32>
    %67 = arith.addf %62, %66 : vector<2x16xf32>
    %c1_20 = arith.constant 1 : index
    %c4_21 = arith.constant 4 : index
    %68 = memref.load %arg1[%c1_20, %c4_21] : memref<4x7xf32, #tpu.memory_space<smem>>
    %69 = vector.extract_strided_slice %2 {offsets = [0, 4], sizes = [2, 16], strides = [1, 1]} : vector<2x22xf32> to vector<2x16xf32>
    %70 = vector.broadcast %68 : f32 to vector<2x16xf32>
    %71 = arith.mulf %70, %69 : vector<2x16xf32>
    %72 = arith.addf %67, %71 : vector<2x16xf32>
    %c1_22 = arith.constant 1 : index
    %c5_23 = arith.constant 5 : index
    %73 = memref.load %arg1[%c1_22, %c5_23] : memref<4x7xf32, #tpu.memory_space<smem>>
    %74 = vector.extract_strided_slice %2 {offsets = [0, 5], sizes = [2, 16], strides = [1, 1]} : vector<2x22xf32> to vector<2x16xf32>
    %75 = vector.broadcast %73 : f32 to vector<2x16xf32>
    %76 = arith.mulf %75, %74 : vector<2x16xf32>
    %77 = arith.addf %72, %76 : vector<2x16xf32>
    %c1_24 = arith.constant 1 : index
    %c6_25 = arith.constant 6 : index
    %78 = memref.load %arg1[%c1_24, %c6_25] : memref<4x7xf32, #tpu.memory_space<smem>>
    %79 = vector.extract_strided_slice %2 {offsets = [0, 6], sizes = [2, 16], strides = [1, 1]} : vector<2x22xf32> to vector<2x16xf32>
    %80 = vector.broadcast %78 : f32 to vector<2x16xf32>
    %81 = arith.mulf %80, %79 : vector<2x16xf32>
    %82 = arith.addf %77, %81 : vector<2x16xf32>
    %cst_26 = arith.constant 0.000000e+00 : f32
    %83 = vector.broadcast %cst_26 : f32 to vector<2x16xf32>
    %84 = arith.maximumf %82, %83 : vector<2x16xf32>
    %85 = vector.extract_strided_slice %84 {offsets = [0, 1], sizes = [2, 15], strides = [1, 1]} : vector<2x16xf32> to vector<2x15xf32>
    %86 = vector.extract_strided_slice %84 {offsets = [0, 0], sizes = [2, 1], strides = [1, 1]} : vector<2x16xf32> to vector<2x1xf32>
    %87 = tpu.concatenate %85, %86 in 1 : vector<2x15xf32>, vector<2x1xf32> -> vector<2x16xf32>
    %88 = arith.maximumf %84, %87 : vector<2x16xf32>
    %c2_27 = arith.constant 2 : index
    %89 = memref.load %arg2[%c2_27] : memref<4xf32, #tpu.memory_space<smem>>
    %90 = vector.broadcast %89 : f32 to vector<2x16xf32>
    %c2_28 = arith.constant 2 : index
    %c0_29 = arith.constant 0 : index
    %91 = memref.load %arg1[%c2_28, %c0_29] : memref<4x7xf32, #tpu.memory_space<smem>>
    %92 = vector.extract_strided_slice %2 {offsets = [0, 0], sizes = [2, 16], strides = [1, 1]} : vector<2x22xf32> to vector<2x16xf32>
    %93 = vector.broadcast %91 : f32 to vector<2x16xf32>
    %94 = arith.mulf %93, %92 : vector<2x16xf32>
    %95 = arith.addf %90, %94 : vector<2x16xf32>
    %c2_30 = arith.constant 2 : index
    %c1_31 = arith.constant 1 : index
    %96 = memref.load %arg1[%c2_30, %c1_31] : memref<4x7xf32, #tpu.memory_space<smem>>
    %97 = vector.extract_strided_slice %2 {offsets = [0, 1], sizes = [2, 16], strides = [1, 1]} : vector<2x22xf32> to vector<2x16xf32>
    %98 = vector.broadcast %96 : f32 to vector<2x16xf32>
    %99 = arith.mulf %98, %97 : vector<2x16xf32>
    %100 = arith.addf %95, %99 : vector<2x16xf32>
    %c2_32 = arith.constant 2 : index
    %c2_33 = arith.constant 2 : index
    %101 = memref.load %arg1[%c2_32, %c2_33] : memref<4x7xf32, #tpu.memory_space<smem>>
    %102 = vector.extract_strided_slice %2 {offsets = [0, 2], sizes = [2, 16], strides = [1, 1]} : vector<2x22xf32> to vector<2x16xf32>
    %103 = vector.broadcast %101 : f32 to vector<2x16xf32>
    %104 = arith.mulf %103, %102 : vector<2x16xf32>
    %105 = arith.addf %100, %104 : vector<2x16xf32>
    %c2_34 = arith.constant 2 : index
    %c3_35 = arith.constant 3 : index
    %106 = memref.load %arg1[%c2_34, %c3_35] : memref<4x7xf32, #tpu.memory_space<smem>>
    %107 = vector.extract_strided_slice %2 {offsets = [0, 3], sizes = [2, 16], strides = [1, 1]} : vector<2x22xf32> to vector<2x16xf32>
    %108 = vector.broadcast %106 : f32 to vector<2x16xf32>
    %109 = arith.mulf %108, %107 : vector<2x16xf32>
    %110 = arith.addf %105, %109 : vector<2x16xf32>
    %c2_36 = arith.constant 2 : index
    %c4_37 = arith.constant 4 : index
    %111 = memref.load %arg1[%c2_36, %c4_37] : memref<4x7xf32, #tpu.memory_space<smem>>
    %112 = vector.extract_strided_slice %2 {offsets = [0, 4], sizes = [2, 16], strides = [1, 1]} : vector<2x22xf32> to vector<2x16xf32>
    %113 = vector.broadcast %111 : f32 to vector<2x16xf32>
    %114 = arith.mulf %113, %112 : vector<2x16xf32>
    %115 = arith.addf %110, %114 : vector<2x16xf32>
    %c2_38 = arith.constant 2 : index
    %c5_39 = arith.constant 5 : index
    %116 = memref.load %arg1[%c2_38, %c5_39] : memref<4x7xf32, #tpu.memory_space<smem>>
    %117 = vector.extract_strided_slice %2 {offsets = [0, 5], sizes = [2, 16], strides = [1, 1]} : vector<2x22xf32> to vector<2x16xf32>
    %118 = vector.broadcast %116 : f32 to vector<2x16xf32>
    %119 = arith.mulf %118, %117 : vector<2x16xf32>
    %120 = arith.addf %115, %119 : vector<2x16xf32>
    %c2_40 = arith.constant 2 : index
    %c6_41 = arith.constant 6 : index
    %121 = memref.load %arg1[%c2_40, %c6_41] : memref<4x7xf32, #tpu.memory_space<smem>>
    %122 = vector.extract_strided_slice %2 {offsets = [0, 6], sizes = [2, 16], strides = [1, 1]} : vector<2x22xf32> to vector<2x16xf32>
    %123 = vector.broadcast %121 : f32 to vector<2x16xf32>
    %124 = arith.mulf %123, %122 : vector<2x16xf32>
    %125 = arith.addf %120, %124 : vector<2x16xf32>
    %cst_42 = arith.constant 0.000000e+00 : f32
    %126 = vector.broadcast %cst_42 : f32 to vector<2x16xf32>
    %127 = arith.maximumf %125, %126 : vector<2x16xf32>
    %128 = vector.extract_strided_slice %127 {offsets = [0, 1], sizes = [2, 15], strides = [1, 1]} : vector<2x16xf32> to vector<2x15xf32>
    %129 = vector.extract_strided_slice %127 {offsets = [0, 0], sizes = [2, 1], strides = [1, 1]} : vector<2x16xf32> to vector<2x1xf32>
    %130 = tpu.concatenate %128, %129 in 1 : vector<2x15xf32>, vector<2x1xf32> -> vector<2x16xf32>
    %131 = arith.maximumf %127, %130 : vector<2x16xf32>
    %c3_43 = arith.constant 3 : index
    %132 = memref.load %arg2[%c3_43] : memref<4xf32, #tpu.memory_space<smem>>
    %133 = vector.broadcast %132 : f32 to vector<2x16xf32>
    %c3_44 = arith.constant 3 : index
    %c0_45 = arith.constant 0 : index
    %134 = memref.load %arg1[%c3_44, %c0_45] : memref<4x7xf32, #tpu.memory_space<smem>>
    %135 = vector.extract_strided_slice %2 {offsets = [0, 0], sizes = [2, 16], strides = [1, 1]} : vector<2x22xf32> to vector<2x16xf32>
    %136 = vector.broadcast %134 : f32 to vector<2x16xf32>
    %137 = arith.mulf %136, %135 : vector<2x16xf32>
    %138 = arith.addf %133, %137 : vector<2x16xf32>
    %c3_46 = arith.constant 3 : index
    %c1_47 = arith.constant 1 : index
    %139 = memref.load %arg1[%c3_46, %c1_47] : memref<4x7xf32, #tpu.memory_space<smem>>
    %140 = vector.extract_strided_slice %2 {offsets = [0, 1], sizes = [2, 16], strides = [1, 1]} : vector<2x22xf32> to vector<2x16xf32>
    %141 = vector.broadcast %139 : f32 to vector<2x16xf32>
    %142 = arith.mulf %141, %140 : vector<2x16xf32>
    %143 = arith.addf %138, %142 : vector<2x16xf32>
    %c3_48 = arith.constant 3 : index
    %c2_49 = arith.constant 2 : index
    %144 = memref.load %arg1[%c3_48, %c2_49] : memref<4x7xf32, #tpu.memory_space<smem>>
    %145 = vector.extract_strided_slice %2 {offsets = [0, 2], sizes = [2, 16], strides = [1, 1]} : vector<2x22xf32> to vector<2x16xf32>
    %146 = vector.broadcast %144 : f32 to vector<2x16xf32>
    %147 = arith.mulf %146, %145 : vector<2x16xf32>
    %148 = arith.addf %143, %147 : vector<2x16xf32>
    %c3_50 = arith.constant 3 : index
    %c3_51 = arith.constant 3 : index
    %149 = memref.load %arg1[%c3_50, %c3_51] : memref<4x7xf32, #tpu.memory_space<smem>>
    %150 = vector.extract_strided_slice %2 {offsets = [0, 3], sizes = [2, 16], strides = [1, 1]} : vector<2x22xf32> to vector<2x16xf32>
    %151 = vector.broadcast %149 : f32 to vector<2x16xf32>
    %152 = arith.mulf %151, %150 : vector<2x16xf32>
    %153 = arith.addf %148, %152 : vector<2x16xf32>
    %c3_52 = arith.constant 3 : index
    %c4_53 = arith.constant 4 : index
    %154 = memref.load %arg1[%c3_52, %c4_53] : memref<4x7xf32, #tpu.memory_space<smem>>
    %155 = vector.extract_strided_slice %2 {offsets = [0, 4], sizes = [2, 16], strides = [1, 1]} : vector<2x22xf32> to vector<2x16xf32>
    %156 = vector.broadcast %154 : f32 to vector<2x16xf32>
    %157 = arith.mulf %156, %155 : vector<2x16xf32>
    %158 = arith.addf %153, %157 : vector<2x16xf32>
    %c3_54 = arith.constant 3 : index
    %c5_55 = arith.constant 5 : index
    %159 = memref.load %arg1[%c3_54, %c5_55] : memref<4x7xf32, #tpu.memory_space<smem>>
    %160 = vector.extract_strided_slice %2 {offsets = [0, 5], sizes = [2, 16], strides = [1, 1]} : vector<2x22xf32> to vector<2x16xf32>
    %161 = vector.broadcast %159 : f32 to vector<2x16xf32>
    %162 = arith.mulf %161, %160 : vector<2x16xf32>
    %163 = arith.addf %158, %162 : vector<2x16xf32>
    %c3_56 = arith.constant 3 : index
    %c6_57 = arith.constant 6 : index
    %164 = memref.load %arg1[%c3_56, %c6_57] : memref<4x7xf32, #tpu.memory_space<smem>>
    %165 = vector.extract_strided_slice %2 {offsets = [0, 6], sizes = [2, 16], strides = [1, 1]} : vector<2x22xf32> to vector<2x16xf32>
    %166 = vector.broadcast %164 : f32 to vector<2x16xf32>
    %167 = arith.mulf %166, %165 : vector<2x16xf32>
    %168 = arith.addf %163, %167 : vector<2x16xf32>
    %cst_58 = arith.constant 0.000000e+00 : f32
    %169 = vector.broadcast %cst_58 : f32 to vector<2x16xf32>
    %170 = arith.maximumf %168, %169 : vector<2x16xf32>
    %171 = vector.extract_strided_slice %170 {offsets = [0, 1], sizes = [2, 15], strides = [1, 1]} : vector<2x16xf32> to vector<2x15xf32>
    %172 = vector.extract_strided_slice %170 {offsets = [0, 0], sizes = [2, 1], strides = [1, 1]} : vector<2x16xf32> to vector<2x1xf32>
    %173 = tpu.concatenate %171, %172 in 1 : vector<2x15xf32>, vector<2x1xf32> -> vector<2x16xf32>
    %174 = arith.maximumf %170, %173 : vector<2x16xf32>
    %cst_59 = arith.constant 0.000000e+00 : f32
    %175 = vector.broadcast %cst_59 : f32 to vector<2x2xf32>
    %176 = tpu.concatenate %175, %45, %175 in 1 : vector<2x2xf32>, vector<2x16xf32>, vector<2x2xf32> -> vector<2x20xf32>
    %177 = tpu.concatenate %175, %88, %175 in 1 : vector<2x2xf32>, vector<2x16xf32>, vector<2x2xf32> -> vector<2x20xf32>
    %178 = tpu.concatenate %175, %131, %175 in 1 : vector<2x2xf32>, vector<2x16xf32>, vector<2x2xf32> -> vector<2x20xf32>
    %179 = tpu.concatenate %175, %174, %175 in 1 : vector<2x2xf32>, vector<2x16xf32>, vector<2x2xf32> -> vector<2x20xf32>
    %c0_60 = arith.constant 0 : index
    %180 = memref.load %arg4[%c0_60] : memref<4xf32, #tpu.memory_space<smem>>
    %181 = vector.broadcast %180 : f32 to vector<2x16xf32>
    %c0_61 = arith.constant 0 : index
    %c0_62 = arith.constant 0 : index
    %182 = memref.load %arg3[%c0_61, %c0_62] : memref<4x12xf32, #tpu.memory_space<smem>>
    %183 = vector.extract_strided_slice %176 {offsets = [0, 0], sizes = [2, 16], strides = [1, 1]} : vector<2x20xf32> to vector<2x16xf32>
    %184 = vector.broadcast %182 : f32 to vector<2x16xf32>
    %185 = arith.mulf %184, %183 : vector<2x16xf32>
    %186 = arith.addf %181, %185 : vector<2x16xf32>
    %c0_63 = arith.constant 0 : index
    %c1_64 = arith.constant 1 : index
    %187 = memref.load %arg3[%c0_63, %c1_64] : memref<4x12xf32, #tpu.memory_space<smem>>
    %188 = vector.extract_strided_slice %176 {offsets = [0, 2], sizes = [2, 16], strides = [1, 1]} : vector<2x20xf32> to vector<2x16xf32>
    %189 = vector.broadcast %187 : f32 to vector<2x16xf32>
    %190 = arith.mulf %189, %188 : vector<2x16xf32>
    %191 = arith.addf %186, %190 : vector<2x16xf32>
    %c0_65 = arith.constant 0 : index
    %c2_66 = arith.constant 2 : index
    %192 = memref.load %arg3[%c0_65, %c2_66] : memref<4x12xf32, #tpu.memory_space<smem>>
    %193 = vector.extract_strided_slice %176 {offsets = [0, 4], sizes = [2, 16], strides = [1, 1]} : vector<2x20xf32> to vector<2x16xf32>
    %194 = vector.broadcast %192 : f32 to vector<2x16xf32>
    %195 = arith.mulf %194, %193 : vector<2x16xf32>
    %196 = arith.addf %191, %195 : vector<2x16xf32>
    %c0_67 = arith.constant 0 : index
    %c3_68 = arith.constant 3 : index
    %197 = memref.load %arg3[%c0_67, %c3_68] : memref<4x12xf32, #tpu.memory_space<smem>>
    %198 = vector.extract_strided_slice %177 {offsets = [0, 0], sizes = [2, 16], strides = [1, 1]} : vector<2x20xf32> to vector<2x16xf32>
    %199 = vector.broadcast %197 : f32 to vector<2x16xf32>
    %200 = arith.mulf %199, %198 : vector<2x16xf32>
    %201 = arith.addf %196, %200 : vector<2x16xf32>
    %c0_69 = arith.constant 0 : index
    %c4_70 = arith.constant 4 : index
    %202 = memref.load %arg3[%c0_69, %c4_70] : memref<4x12xf32, #tpu.memory_space<smem>>
    %203 = vector.extract_strided_slice %177 {offsets = [0, 2], sizes = [2, 16], strides = [1, 1]} : vector<2x20xf32> to vector<2x16xf32>
    %204 = vector.broadcast %202 : f32 to vector<2x16xf32>
    %205 = arith.mulf %204, %203 : vector<2x16xf32>
    %206 = arith.addf %201, %205 : vector<2x16xf32>
    %c0_71 = arith.constant 0 : index
    %c5_72 = arith.constant 5 : index
    %207 = memref.load %arg3[%c0_71, %c5_72] : memref<4x12xf32, #tpu.memory_space<smem>>
    %208 = vector.extract_strided_slice %177 {offsets = [0, 4], sizes = [2, 16], strides = [1, 1]} : vector<2x20xf32> to vector<2x16xf32>
    %209 = vector.broadcast %207 : f32 to vector<2x16xf32>
    %210 = arith.mulf %209, %208 : vector<2x16xf32>
    %211 = arith.addf %206, %210 : vector<2x16xf32>
    %c0_73 = arith.constant 0 : index
    %c6_74 = arith.constant 6 : index
    %212 = memref.load %arg3[%c0_73, %c6_74] : memref<4x12xf32, #tpu.memory_space<smem>>
    %213 = vector.extract_strided_slice %178 {offsets = [0, 0], sizes = [2, 16], strides = [1, 1]} : vector<2x20xf32> to vector<2x16xf32>
    %214 = vector.broadcast %212 : f32 to vector<2x16xf32>
    %215 = arith.mulf %214, %213 : vector<2x16xf32>
    %216 = arith.addf %211, %215 : vector<2x16xf32>
    %c0_75 = arith.constant 0 : index
    %c7 = arith.constant 7 : index
    %217 = memref.load %arg3[%c0_75, %c7] : memref<4x12xf32, #tpu.memory_space<smem>>
    %218 = vector.extract_strided_slice %178 {offsets = [0, 2], sizes = [2, 16], strides = [1, 1]} : vector<2x20xf32> to vector<2x16xf32>
    %219 = vector.broadcast %217 : f32 to vector<2x16xf32>
    %220 = arith.mulf %219, %218 : vector<2x16xf32>
    %221 = arith.addf %216, %220 : vector<2x16xf32>
    %c0_76 = arith.constant 0 : index
    %c8 = arith.constant 8 : index
    %222 = memref.load %arg3[%c0_76, %c8] : memref<4x12xf32, #tpu.memory_space<smem>>
    %223 = vector.extract_strided_slice %178 {offsets = [0, 4], sizes = [2, 16], strides = [1, 1]} : vector<2x20xf32> to vector<2x16xf32>
    %224 = vector.broadcast %222 : f32 to vector<2x16xf32>
    %225 = arith.mulf %224, %223 : vector<2x16xf32>
    %226 = arith.addf %221, %225 : vector<2x16xf32>
    %c0_77 = arith.constant 0 : index
    %c9 = arith.constant 9 : index
    %227 = memref.load %arg3[%c0_77, %c9] : memref<4x12xf32, #tpu.memory_space<smem>>
    %228 = vector.extract_strided_slice %179 {offsets = [0, 0], sizes = [2, 16], strides = [1, 1]} : vector<2x20xf32> to vector<2x16xf32>
    %229 = vector.broadcast %227 : f32 to vector<2x16xf32>
    %230 = arith.mulf %229, %228 : vector<2x16xf32>
    %231 = arith.addf %226, %230 : vector<2x16xf32>
    %c0_78 = arith.constant 0 : index
    %c10 = arith.constant 10 : index
    %232 = memref.load %arg3[%c0_78, %c10] : memref<4x12xf32, #tpu.memory_space<smem>>
    %233 = vector.extract_strided_slice %179 {offsets = [0, 2], sizes = [2, 16], strides = [1, 1]} : vector<2x20xf32> to vector<2x16xf32>
    %234 = vector.broadcast %232 : f32 to vector<2x16xf32>
    %235 = arith.mulf %234, %233 : vector<2x16xf32>
    %236 = arith.addf %231, %235 : vector<2x16xf32>
    %c0_79 = arith.constant 0 : index
    %c11 = arith.constant 11 : index
    %237 = memref.load %arg3[%c0_79, %c11] : memref<4x12xf32, #tpu.memory_space<smem>>
    %238 = vector.extract_strided_slice %179 {offsets = [0, 4], sizes = [2, 16], strides = [1, 1]} : vector<2x20xf32> to vector<2x16xf32>
    %239 = vector.broadcast %237 : f32 to vector<2x16xf32>
    %240 = arith.mulf %239, %238 : vector<2x16xf32>
    %241 = arith.addf %236, %240 : vector<2x16xf32>
    %cst_80 = arith.constant 0.000000e+00 : f32
    %242 = vector.broadcast %cst_80 : f32 to vector<2x16xf32>
    %243 = arith.maximumf %241, %242 : vector<2x16xf32>
    %244 = vector.extract_strided_slice %243 {offsets = [0, 2], sizes = [2, 14], strides = [1, 1]} : vector<2x16xf32> to vector<2x14xf32>
    %245 = vector.extract_strided_slice %243 {offsets = [0, 0], sizes = [2, 2], strides = [1, 1]} : vector<2x16xf32> to vector<2x2xf32>
    %246 = tpu.concatenate %244, %245 in 1 : vector<2x14xf32>, vector<2x2xf32> -> vector<2x16xf32>
    %247 = arith.maximumf %243, %246 : vector<2x16xf32>
    %c1_81 = arith.constant 1 : index
    %248 = memref.load %arg4[%c1_81] : memref<4xf32, #tpu.memory_space<smem>>
    %249 = vector.broadcast %248 : f32 to vector<2x16xf32>
    %c1_82 = arith.constant 1 : index
    %c0_83 = arith.constant 0 : index
    %250 = memref.load %arg3[%c1_82, %c0_83] : memref<4x12xf32, #tpu.memory_space<smem>>
    %251 = vector.extract_strided_slice %176 {offsets = [0, 0], sizes = [2, 16], strides = [1, 1]} : vector<2x20xf32> to vector<2x16xf32>
    %252 = vector.broadcast %250 : f32 to vector<2x16xf32>
    %253 = arith.mulf %252, %251 : vector<2x16xf32>
    %254 = arith.addf %249, %253 : vector<2x16xf32>
    %c1_84 = arith.constant 1 : index
    %c1_85 = arith.constant 1 : index
    %255 = memref.load %arg3[%c1_84, %c1_85] : memref<4x12xf32, #tpu.memory_space<smem>>
    %256 = vector.extract_strided_slice %176 {offsets = [0, 2], sizes = [2, 16], strides = [1, 1]} : vector<2x20xf32> to vector<2x16xf32>
    %257 = vector.broadcast %255 : f32 to vector<2x16xf32>
    %258 = arith.mulf %257, %256 : vector<2x16xf32>
    %259 = arith.addf %254, %258 : vector<2x16xf32>
    %c1_86 = arith.constant 1 : index
    %c2_87 = arith.constant 2 : index
    %260 = memref.load %arg3[%c1_86, %c2_87] : memref<4x12xf32, #tpu.memory_space<smem>>
    %261 = vector.extract_strided_slice %176 {offsets = [0, 4], sizes = [2, 16], strides = [1, 1]} : vector<2x20xf32> to vector<2x16xf32>
    %262 = vector.broadcast %260 : f32 to vector<2x16xf32>
    %263 = arith.mulf %262, %261 : vector<2x16xf32>
    %264 = arith.addf %259, %263 : vector<2x16xf32>
    %c1_88 = arith.constant 1 : index
    %c3_89 = arith.constant 3 : index
    %265 = memref.load %arg3[%c1_88, %c3_89] : memref<4x12xf32, #tpu.memory_space<smem>>
    %266 = vector.extract_strided_slice %177 {offsets = [0, 0], sizes = [2, 16], strides = [1, 1]} : vector<2x20xf32> to vector<2x16xf32>
    %267 = vector.broadcast %265 : f32 to vector<2x16xf32>
    %268 = arith.mulf %267, %266 : vector<2x16xf32>
    %269 = arith.addf %264, %268 : vector<2x16xf32>
    %c1_90 = arith.constant 1 : index
    %c4_91 = arith.constant 4 : index
    %270 = memref.load %arg3[%c1_90, %c4_91] : memref<4x12xf32, #tpu.memory_space<smem>>
    %271 = vector.extract_strided_slice %177 {offsets = [0, 2], sizes = [2, 16], strides = [1, 1]} : vector<2x20xf32> to vector<2x16xf32>
    %272 = vector.broadcast %270 : f32 to vector<2x16xf32>
    %273 = arith.mulf %272, %271 : vector<2x16xf32>
    %274 = arith.addf %269, %273 : vector<2x16xf32>
    %c1_92 = arith.constant 1 : index
    %c5_93 = arith.constant 5 : index
    %275 = memref.load %arg3[%c1_92, %c5_93] : memref<4x12xf32, #tpu.memory_space<smem>>
    %276 = vector.extract_strided_slice %177 {offsets = [0, 4], sizes = [2, 16], strides = [1, 1]} : vector<2x20xf32> to vector<2x16xf32>
    %277 = vector.broadcast %275 : f32 to vector<2x16xf32>
    %278 = arith.mulf %277, %276 : vector<2x16xf32>
    %279 = arith.addf %274, %278 : vector<2x16xf32>
    %c1_94 = arith.constant 1 : index
    %c6_95 = arith.constant 6 : index
    %280 = memref.load %arg3[%c1_94, %c6_95] : memref<4x12xf32, #tpu.memory_space<smem>>
    %281 = vector.extract_strided_slice %178 {offsets = [0, 0], sizes = [2, 16], strides = [1, 1]} : vector<2x20xf32> to vector<2x16xf32>
    %282 = vector.broadcast %280 : f32 to vector<2x16xf32>
    %283 = arith.mulf %282, %281 : vector<2x16xf32>
    %284 = arith.addf %279, %283 : vector<2x16xf32>
    %c1_96 = arith.constant 1 : index
    %c7_97 = arith.constant 7 : index
    %285 = memref.load %arg3[%c1_96, %c7_97] : memref<4x12xf32, #tpu.memory_space<smem>>
    %286 = vector.extract_strided_slice %178 {offsets = [0, 2], sizes = [2, 16], strides = [1, 1]} : vector<2x20xf32> to vector<2x16xf32>
    %287 = vector.broadcast %285 : f32 to vector<2x16xf32>
    %288 = arith.mulf %287, %286 : vector<2x16xf32>
    %289 = arith.addf %284, %288 : vector<2x16xf32>
    %c1_98 = arith.constant 1 : index
    %c8_99 = arith.constant 8 : index
    %290 = memref.load %arg3[%c1_98, %c8_99] : memref<4x12xf32, #tpu.memory_space<smem>>
    %291 = vector.extract_strided_slice %178 {offsets = [0, 4], sizes = [2, 16], strides = [1, 1]} : vector<2x20xf32> to vector<2x16xf32>
    %292 = vector.broadcast %290 : f32 to vector<2x16xf32>
    %293 = arith.mulf %292, %291 : vector<2x16xf32>
    %294 = arith.addf %289, %293 : vector<2x16xf32>
    %c1_100 = arith.constant 1 : index
    %c9_101 = arith.constant 9 : index
    %295 = memref.load %arg3[%c1_100, %c9_101] : memref<4x12xf32, #tpu.memory_space<smem>>
    %296 = vector.extract_strided_slice %179 {offsets = [0, 0], sizes = [2, 16], strides = [1, 1]} : vector<2x20xf32> to vector<2x16xf32>
    %297 = vector.broadcast %295 : f32 to vector<2x16xf32>
    %298 = arith.mulf %297, %296 : vector<2x16xf32>
    %299 = arith.addf %294, %298 : vector<2x16xf32>
    %c1_102 = arith.constant 1 : index
    %c10_103 = arith.constant 10 : index
    %300 = memref.load %arg3[%c1_102, %c10_103] : memref<4x12xf32, #tpu.memory_space<smem>>
    %301 = vector.extract_strided_slice %179 {offsets = [0, 2], sizes = [2, 16], strides = [1, 1]} : vector<2x20xf32> to vector<2x16xf32>
    %302 = vector.broadcast %300 : f32 to vector<2x16xf32>
    %303 = arith.mulf %302, %301 : vector<2x16xf32>
    %304 = arith.addf %299, %303 : vector<2x16xf32>
    %c1_104 = arith.constant 1 : index
    %c11_105 = arith.constant 11 : index
    %305 = memref.load %arg3[%c1_104, %c11_105] : memref<4x12xf32, #tpu.memory_space<smem>>
    %306 = vector.extract_strided_slice %179 {offsets = [0, 4], sizes = [2, 16], strides = [1, 1]} : vector<2x20xf32> to vector<2x16xf32>
    %307 = vector.broadcast %305 : f32 to vector<2x16xf32>
    %308 = arith.mulf %307, %306 : vector<2x16xf32>
    %309 = arith.addf %304, %308 : vector<2x16xf32>
    %cst_106 = arith.constant 0.000000e+00 : f32
    %310 = vector.broadcast %cst_106 : f32 to vector<2x16xf32>
    %311 = arith.maximumf %309, %310 : vector<2x16xf32>
    %312 = vector.extract_strided_slice %311 {offsets = [0, 2], sizes = [2, 14], strides = [1, 1]} : vector<2x16xf32> to vector<2x14xf32>
    %313 = vector.extract_strided_slice %311 {offsets = [0, 0], sizes = [2, 2], strides = [1, 1]} : vector<2x16xf32> to vector<2x2xf32>
    %314 = tpu.concatenate %312, %313 in 1 : vector<2x14xf32>, vector<2x2xf32> -> vector<2x16xf32>
    %315 = arith.maximumf %311, %314 : vector<2x16xf32>
    %c2_107 = arith.constant 2 : index
    %316 = memref.load %arg4[%c2_107] : memref<4xf32, #tpu.memory_space<smem>>
    %317 = vector.broadcast %316 : f32 to vector<2x16xf32>
    %c2_108 = arith.constant 2 : index
    %c0_109 = arith.constant 0 : index
    %318 = memref.load %arg3[%c2_108, %c0_109] : memref<4x12xf32, #tpu.memory_space<smem>>
    %319 = vector.extract_strided_slice %176 {offsets = [0, 0], sizes = [2, 16], strides = [1, 1]} : vector<2x20xf32> to vector<2x16xf32>
    %320 = vector.broadcast %318 : f32 to vector<2x16xf32>
    %321 = arith.mulf %320, %319 : vector<2x16xf32>
    %322 = arith.addf %317, %321 : vector<2x16xf32>
    %c2_110 = arith.constant 2 : index
    %c1_111 = arith.constant 1 : index
    %323 = memref.load %arg3[%c2_110, %c1_111] : memref<4x12xf32, #tpu.memory_space<smem>>
    %324 = vector.extract_strided_slice %176 {offsets = [0, 2], sizes = [2, 16], strides = [1, 1]} : vector<2x20xf32> to vector<2x16xf32>
    %325 = vector.broadcast %323 : f32 to vector<2x16xf32>
    %326 = arith.mulf %325, %324 : vector<2x16xf32>
    %327 = arith.addf %322, %326 : vector<2x16xf32>
    %c2_112 = arith.constant 2 : index
    %c2_113 = arith.constant 2 : index
    %328 = memref.load %arg3[%c2_112, %c2_113] : memref<4x12xf32, #tpu.memory_space<smem>>
    %329 = vector.extract_strided_slice %176 {offsets = [0, 4], sizes = [2, 16], strides = [1, 1]} : vector<2x20xf32> to vector<2x16xf32>
    %330 = vector.broadcast %328 : f32 to vector<2x16xf32>
    %331 = arith.mulf %330, %329 : vector<2x16xf32>
    %332 = arith.addf %327, %331 : vector<2x16xf32>
    %c2_114 = arith.constant 2 : index
    %c3_115 = arith.constant 3 : index
    %333 = memref.load %arg3[%c2_114, %c3_115] : memref<4x12xf32, #tpu.memory_space<smem>>
    %334 = vector.extract_strided_slice %177 {offsets = [0, 0], sizes = [2, 16], strides = [1, 1]} : vector<2x20xf32> to vector<2x16xf32>
    %335 = vector.broadcast %333 : f32 to vector<2x16xf32>
    %336 = arith.mulf %335, %334 : vector<2x16xf32>
    %337 = arith.addf %332, %336 : vector<2x16xf32>
    %c2_116 = arith.constant 2 : index
    %c4_117 = arith.constant 4 : index
    %338 = memref.load %arg3[%c2_116, %c4_117] : memref<4x12xf32, #tpu.memory_space<smem>>
    %339 = vector.extract_strided_slice %177 {offsets = [0, 2], sizes = [2, 16], strides = [1, 1]} : vector<2x20xf32> to vector<2x16xf32>
    %340 = vector.broadcast %338 : f32 to vector<2x16xf32>
    %341 = arith.mulf %340, %339 : vector<2x16xf32>
    %342 = arith.addf %337, %341 : vector<2x16xf32>
    %c2_118 = arith.constant 2 : index
    %c5_119 = arith.constant 5 : index
    %343 = memref.load %arg3[%c2_118, %c5_119] : memref<4x12xf32, #tpu.memory_space<smem>>
    %344 = vector.extract_strided_slice %177 {offsets = [0, 4], sizes = [2, 16], strides = [1, 1]} : vector<2x20xf32> to vector<2x16xf32>
    %345 = vector.broadcast %343 : f32 to vector<2x16xf32>
    %346 = arith.mulf %345, %344 : vector<2x16xf32>
    %347 = arith.addf %342, %346 : vector<2x16xf32>
    %c2_120 = arith.constant 2 : index
    %c6_121 = arith.constant 6 : index
    %348 = memref.load %arg3[%c2_120, %c6_121] : memref<4x12xf32, #tpu.memory_space<smem>>
    %349 = vector.extract_strided_slice %178 {offsets = [0, 0], sizes = [2, 16], strides = [1, 1]} : vector<2x20xf32> to vector<2x16xf32>
    %350 = vector.broadcast %348 : f32 to vector<2x16xf32>
    %351 = arith.mulf %350, %349 : vector<2x16xf32>
    %352 = arith.addf %347, %351 : vector<2x16xf32>
    %c2_122 = arith.constant 2 : index
    %c7_123 = arith.constant 7 : index
    %353 = memref.load %arg3[%c2_122, %c7_123] : memref<4x12xf32, #tpu.memory_space<smem>>
    %354 = vector.extract_strided_slice %178 {offsets = [0, 2], sizes = [2, 16], strides = [1, 1]} : vector<2x20xf32> to vector<2x16xf32>
    %355 = vector.broadcast %353 : f32 to vector<2x16xf32>
    %356 = arith.mulf %355, %354 : vector<2x16xf32>
    %357 = arith.addf %352, %356 : vector<2x16xf32>
    %c2_124 = arith.constant 2 : index
    %c8_125 = arith.constant 8 : index
    %358 = memref.load %arg3[%c2_124, %c8_125] : memref<4x12xf32, #tpu.memory_space<smem>>
    %359 = vector.extract_strided_slice %178 {offsets = [0, 4], sizes = [2, 16], strides = [1, 1]} : vector<2x20xf32> to vector<2x16xf32>
    %360 = vector.broadcast %358 : f32 to vector<2x16xf32>
    %361 = arith.mulf %360, %359 : vector<2x16xf32>
    %362 = arith.addf %357, %361 : vector<2x16xf32>
    %c2_126 = arith.constant 2 : index
    %c9_127 = arith.constant 9 : index
    %363 = memref.load %arg3[%c2_126, %c9_127] : memref<4x12xf32, #tpu.memory_space<smem>>
    %364 = vector.extract_strided_slice %179 {offsets = [0, 0], sizes = [2, 16], strides = [1, 1]} : vector<2x20xf32> to vector<2x16xf32>
    %365 = vector.broadcast %363 : f32 to vector<2x16xf32>
    %366 = arith.mulf %365, %364 : vector<2x16xf32>
    %367 = arith.addf %362, %366 : vector<2x16xf32>
    %c2_128 = arith.constant 2 : index
    %c10_129 = arith.constant 10 : index
    %368 = memref.load %arg3[%c2_128, %c10_129] : memref<4x12xf32, #tpu.memory_space<smem>>
    %369 = vector.extract_strided_slice %179 {offsets = [0, 2], sizes = [2, 16], strides = [1, 1]} : vector<2x20xf32> to vector<2x16xf32>
    %370 = vector.broadcast %368 : f32 to vector<2x16xf32>
    %371 = arith.mulf %370, %369 : vector<2x16xf32>
    %372 = arith.addf %367, %371 : vector<2x16xf32>
    %c2_130 = arith.constant 2 : index
    %c11_131 = arith.constant 11 : index
    %373 = memref.load %arg3[%c2_130, %c11_131] : memref<4x12xf32, #tpu.memory_space<smem>>
    %374 = vector.extract_strided_slice %179 {offsets = [0, 4], sizes = [2, 16], strides = [1, 1]} : vector<2x20xf32> to vector<2x16xf32>
    %375 = vector.broadcast %373 : f32 to vector<2x16xf32>
    %376 = arith.mulf %375, %374 : vector<2x16xf32>
    %377 = arith.addf %372, %376 : vector<2x16xf32>
    %cst_132 = arith.constant 0.000000e+00 : f32
    %378 = vector.broadcast %cst_132 : f32 to vector<2x16xf32>
    %379 = arith.maximumf %377, %378 : vector<2x16xf32>
    %380 = vector.extract_strided_slice %379 {offsets = [0, 2], sizes = [2, 14], strides = [1, 1]} : vector<2x16xf32> to vector<2x14xf32>
    %381 = vector.extract_strided_slice %379 {offsets = [0, 0], sizes = [2, 2], strides = [1, 1]} : vector<2x16xf32> to vector<2x2xf32>
    %382 = tpu.concatenate %380, %381 in 1 : vector<2x14xf32>, vector<2x2xf32> -> vector<2x16xf32>
    %383 = arith.maximumf %379, %382 : vector<2x16xf32>
    %c3_133 = arith.constant 3 : index
    %384 = memref.load %arg4[%c3_133] : memref<4xf32, #tpu.memory_space<smem>>
    %385 = vector.broadcast %384 : f32 to vector<2x16xf32>
    %c3_134 = arith.constant 3 : index
    %c0_135 = arith.constant 0 : index
    %386 = memref.load %arg3[%c3_134, %c0_135] : memref<4x12xf32, #tpu.memory_space<smem>>
    %387 = vector.extract_strided_slice %176 {offsets = [0, 0], sizes = [2, 16], strides = [1, 1]} : vector<2x20xf32> to vector<2x16xf32>
    %388 = vector.broadcast %386 : f32 to vector<2x16xf32>
    %389 = arith.mulf %388, %387 : vector<2x16xf32>
    %390 = arith.addf %385, %389 : vector<2x16xf32>
    %c3_136 = arith.constant 3 : index
    %c1_137 = arith.constant 1 : index
    %391 = memref.load %arg3[%c3_136, %c1_137] : memref<4x12xf32, #tpu.memory_space<smem>>
    %392 = vector.extract_strided_slice %176 {offsets = [0, 2], sizes = [2, 16], strides = [1, 1]} : vector<2x20xf32> to vector<2x16xf32>
    %393 = vector.broadcast %391 : f32 to vector<2x16xf32>
    %394 = arith.mulf %393, %392 : vector<2x16xf32>
    %395 = arith.addf %390, %394 : vector<2x16xf32>
    %c3_138 = arith.constant 3 : index
    %c2_139 = arith.constant 2 : index
    %396 = memref.load %arg3[%c3_138, %c2_139] : memref<4x12xf32, #tpu.memory_space<smem>>
    %397 = vector.extract_strided_slice %176 {offsets = [0, 4], sizes = [2, 16], strides = [1, 1]} : vector<2x20xf32> to vector<2x16xf32>
    %398 = vector.broadcast %396 : f32 to vector<2x16xf32>
    %399 = arith.mulf %398, %397 : vector<2x16xf32>
    %400 = arith.addf %395, %399 : vector<2x16xf32>
    %c3_140 = arith.constant 3 : index
    %c3_141 = arith.constant 3 : index
    %401 = memref.load %arg3[%c3_140, %c3_141] : memref<4x12xf32, #tpu.memory_space<smem>>
    %402 = vector.extract_strided_slice %177 {offsets = [0, 0], sizes = [2, 16], strides = [1, 1]} : vector<2x20xf32> to vector<2x16xf32>
    %403 = vector.broadcast %401 : f32 to vector<2x16xf32>
    %404 = arith.mulf %403, %402 : vector<2x16xf32>
    %405 = arith.addf %400, %404 : vector<2x16xf32>
    %c3_142 = arith.constant 3 : index
    %c4_143 = arith.constant 4 : index
    %406 = memref.load %arg3[%c3_142, %c4_143] : memref<4x12xf32, #tpu.memory_space<smem>>
    %407 = vector.extract_strided_slice %177 {offsets = [0, 2], sizes = [2, 16], strides = [1, 1]} : vector<2x20xf32> to vector<2x16xf32>
    %408 = vector.broadcast %406 : f32 to vector<2x16xf32>
    %409 = arith.mulf %408, %407 : vector<2x16xf32>
    %410 = arith.addf %405, %409 : vector<2x16xf32>
    %c3_144 = arith.constant 3 : index
    %c5_145 = arith.constant 5 : index
    %411 = memref.load %arg3[%c3_144, %c5_145] : memref<4x12xf32, #tpu.memory_space<smem>>
    %412 = vector.extract_strided_slice %177 {offsets = [0, 4], sizes = [2, 16], strides = [1, 1]} : vector<2x20xf32> to vector<2x16xf32>
    %413 = vector.broadcast %411 : f32 to vector<2x16xf32>
    %414 = arith.mulf %413, %412 : vector<2x16xf32>
    %415 = arith.addf %410, %414 : vector<2x16xf32>
    %c3_146 = arith.constant 3 : index
    %c6_147 = arith.constant 6 : index
    %416 = memref.load %arg3[%c3_146, %c6_147] : memref<4x12xf32, #tpu.memory_space<smem>>
    %417 = vector.extract_strided_slice %178 {offsets = [0, 0], sizes = [2, 16], strides = [1, 1]} : vector<2x20xf32> to vector<2x16xf32>
    %418 = vector.broadcast %416 : f32 to vector<2x16xf32>
    %419 = arith.mulf %418, %417 : vector<2x16xf32>
    %420 = arith.addf %415, %419 : vector<2x16xf32>
    %c3_148 = arith.constant 3 : index
    %c7_149 = arith.constant 7 : index
    %421 = memref.load %arg3[%c3_148, %c7_149] : memref<4x12xf32, #tpu.memory_space<smem>>
    %422 = vector.extract_strided_slice %178 {offsets = [0, 2], sizes = [2, 16], strides = [1, 1]} : vector<2x20xf32> to vector<2x16xf32>
    %423 = vector.broadcast %421 : f32 to vector<2x16xf32>
    %424 = arith.mulf %423, %422 : vector<2x16xf32>
    %425 = arith.addf %420, %424 : vector<2x16xf32>
    %c3_150 = arith.constant 3 : index
    %c8_151 = arith.constant 8 : index
    %426 = memref.load %arg3[%c3_150, %c8_151] : memref<4x12xf32, #tpu.memory_space<smem>>
    %427 = vector.extract_strided_slice %178 {offsets = [0, 4], sizes = [2, 16], strides = [1, 1]} : vector<2x20xf32> to vector<2x16xf32>
    %428 = vector.broadcast %426 : f32 to vector<2x16xf32>
    %429 = arith.mulf %428, %427 : vector<2x16xf32>
    %430 = arith.addf %425, %429 : vector<2x16xf32>
    %c3_152 = arith.constant 3 : index
    %c9_153 = arith.constant 9 : index
    %431 = memref.load %arg3[%c3_152, %c9_153] : memref<4x12xf32, #tpu.memory_space<smem>>
    %432 = vector.extract_strided_slice %179 {offsets = [0, 0], sizes = [2, 16], strides = [1, 1]} : vector<2x20xf32> to vector<2x16xf32>
    %433 = vector.broadcast %431 : f32 to vector<2x16xf32>
    %434 = arith.mulf %433, %432 : vector<2x16xf32>
    %435 = arith.addf %430, %434 : vector<2x16xf32>
    %c3_154 = arith.constant 3 : index
    %c10_155 = arith.constant 10 : index
    %436 = memref.load %arg3[%c3_154, %c10_155] : memref<4x12xf32, #tpu.memory_space<smem>>
    %437 = vector.extract_strided_slice %179 {offsets = [0, 2], sizes = [2, 16], strides = [1, 1]} : vector<2x20xf32> to vector<2x16xf32>
    %438 = vector.broadcast %436 : f32 to vector<2x16xf32>
    %439 = arith.mulf %438, %437 : vector<2x16xf32>
    %440 = arith.addf %435, %439 : vector<2x16xf32>
    %c3_156 = arith.constant 3 : index
    %c11_157 = arith.constant 11 : index
    %441 = memref.load %arg3[%c3_156, %c11_157] : memref<4x12xf32, #tpu.memory_space<smem>>
    %442 = vector.extract_strided_slice %179 {offsets = [0, 4], sizes = [2, 16], strides = [1, 1]} : vector<2x20xf32> to vector<2x16xf32>
    %443 = vector.broadcast %441 : f32 to vector<2x16xf32>
    %444 = arith.mulf %443, %442 : vector<2x16xf32>
    %445 = arith.addf %440, %444 : vector<2x16xf32>
    %cst_158 = arith.constant 0.000000e+00 : f32
    %446 = vector.broadcast %cst_158 : f32 to vector<2x16xf32>
    %447 = arith.maximumf %445, %446 : vector<2x16xf32>
    %448 = vector.extract_strided_slice %447 {offsets = [0, 2], sizes = [2, 14], strides = [1, 1]} : vector<2x16xf32> to vector<2x14xf32>
    %449 = vector.extract_strided_slice %447 {offsets = [0, 0], sizes = [2, 2], strides = [1, 1]} : vector<2x16xf32> to vector<2x2xf32>
    %450 = tpu.concatenate %448, %449 in 1 : vector<2x14xf32>, vector<2x2xf32> -> vector<2x16xf32>
    %451 = arith.maximumf %447, %450 : vector<2x16xf32>
    %452 = tpu.concatenate %247, %315, %383, %451 in 1 : vector<2x16xf32>, vector<2x16xf32>, vector<2x16xf32>, vector<2x16xf32> -> vector<2x64xf32>
    %c0_159 = arith.constant 0 : index
    %c0_160 = arith.constant 0 : index
    %453 = vector.load %arg5[%c0_159, %c0_160] : memref<64x32xf32, #tpu.memory_space<vmem>>, vector<64x32xf32>
    %cst_161 = arith.constant dense<0.000000e+00> : vector<2x32xf32>
    %454 = tpu.matmul %452, %453, %cst_161 {dimension_numbers = #tpu.dot_dimension_numbers<[1], [0], [0], [1], [0, 0, 1, 1], [], []>} : vector<2x64xf32>, vector<64x32xf32>, vector<2x32xf32> -> vector<2x32xf32>
    %c0_162 = arith.constant 0 : index
    %c0_163 = arith.constant 0 : index
    %455 = vector.load %arg6[%c0_162, %c0_163] : memref<1x32xf32, #tpu.memory_space<vmem>>, vector<1x32xf32>
    %456 = vector.broadcast %455 : vector<1x32xf32> to vector<2x32xf32>
    %457 = arith.addf %454, %456 : vector<2x32xf32>
    %c0_164 = arith.constant 0 : index
    %c0_165 = arith.constant 0 : index
    %458 = vector.load %arg7[%c0_164, %c0_165] : memref<32x32xf32, #tpu.memory_space<vmem>>, vector<32x32xf32>
    %cst_166 = arith.constant dense<0.000000e+00> : vector<2x32xf32>
    %459 = tpu.matmul %457, %458, %cst_166 {dimension_numbers = #tpu.dot_dimension_numbers<[1], [0], [0], [1], [0, 0, 1, 1], [], []>} : vector<2x32xf32>, vector<32x32xf32>, vector<2x32xf32> -> vector<2x32xf32>
    %c0_167 = arith.constant 0 : index
    %c0_168 = arith.constant 0 : index
    %460 = vector.load %arg8[%c0_167, %c0_168] : memref<1x32xf32, #tpu.memory_space<vmem>>, vector<1x32xf32>
    %461 = vector.broadcast %460 : vector<1x32xf32> to vector<2x32xf32>
    %462 = arith.addf %459, %461 : vector<2x32xf32>
    %c0_169 = arith.constant 0 : index
    %c0_170 = arith.constant 0 : index
    %463 = vector.load %arg9[%c0_169, %c0_170] : memref<32x1xf32, #tpu.memory_space<vmem>>, vector<32x1xf32>
    %cst_171 = arith.constant dense<0.000000e+00> : vector<2x1xf32>
    %464 = tpu.matmul %462, %463, %cst_171 {dimension_numbers = #tpu.dot_dimension_numbers<[1], [0], [0], [1], [0, 0, 1, 1], [], []>} : vector<2x32xf32>, vector<32x1xf32>, vector<2x1xf32> -> vector<2x1xf32>
    %c0_172 = arith.constant 0 : index
    %c0_173 = arith.constant 0 : index
    %465 = vector.load %arg10[%c0_172, %c0_173] : memref<1x1xf32, #tpu.memory_space<vmem>>, vector<1x1xf32>
    %466 = vector.broadcast %465 : vector<1x1xf32> to vector<2x1xf32>
    %467 = arith.addf %464, %466 : vector<2x1xf32>
    %c0_174 = arith.constant 0 : index
    %c0_175 = arith.constant 0 : index
    %468 = vector.load %arg11[%c0_174, %c0_175] : memref<2x1xf32, #tpu.memory_space<vmem>>, vector<2x1xf32>
    tpu.vector_store %arg11[%c0_174, %c0_175], %467 {strides = array<i32>} : memref<2x1xf32, #tpu.memory_space<vmem>>, vector<2x1xf32>,
    return
  }
}

</mosaic_0001>

<llo_original>
// kernel: cnn_light_forward.1
$region0: #{cnn_light_forward.1}
  #allocation0 [shape = 'u32[]', space=smem, size = 0x4, offset = 0x4, fixed_abs, tag = 'smem constant byte address 0x4 - core index']
  #allocation1 [shape = 'u32[144,128]{1,0:T(1,128)}', space=vmem, size = 0x12000, scoped, tag = 'internal scratch']
  #allocation2 [shape = 'f32[1,1]{1,0:T(1,128)S(1)}', space=vmem, size = 0x200, scoped, tag = 'scoped memory for cnn_light_forward.1']
  %s0 = inlined_call_operand.vmem [shape: f32[2,16], index: 0, kind: input, shape index: {}]
  %s1 = inlined_call_operand.vmem [shape: f32[4,7], index: 1, kind: input, shape index: {}]
  %s2 = inlined_call_operand.vmem [shape: f32[4], index: 2, kind: input, shape index: {}]
  %s3 = inlined_call_operand.vmem [shape: f32[4,12], index: 3, kind: input, shape index: {}]
  %s4 = inlined_call_operand.vmem [shape: f32[4], index: 4, kind: input, shape index: {}]
  %s5 = inlined_call_operand.vmem [shape: f32[64,32], index: 5, kind: input, shape index: {}]
  %s6 = inlined_call_operand.vmem [shape: f32[1,32], index: 6, kind: input, shape index: {}]
  %s7 = inlined_call_operand.vmem [shape: f32[32,32], index: 7, kind: input, shape index: {}]
  %s8 = inlined_call_operand.vmem [shape: f32[1,32], index: 8, kind: input, shape index: {}]
  %s9 = inlined_call_operand.vmem [shape: f32[32,1], index: 9, kind: input, shape index: {}]
  %s10 = inlined_call_operand.<no memory space> [shape: f32[1,1], index: 10, kind: input, shape index: {}]
  %s11 = inlined_call_operand.vmem [shape: f32[2,1], index: 11, kind: output, shape index: {}]
  %s12 = sld [smem:[#allocation0]]
  $region70: #{cnn_light_forward.1} parent=0
    _
  %s14 = ssub.s32 1, %s12
  %s15 = scalar_select 0, %s14, %s12
  %v16 = vstv %s10
  %17 = vst [vmem:[#allocation2] sm:$0x1] %v16
  $region1: #{cnn_light_forward.1} parent=0
    #allocation3 [shape = 'u8[2048]{0}', space=smem, size = 0x800, scoped, tag = 'input window, operand 1, single buffered']
    #allocation4 [shape = 's32[1]{0}', space=sflag, size = 0x4, scoped, tag = 'scoped memory for cnn_light_forward.1']
    #allocation5 [shape = 'u8[512]{0}', space=smem, size = 0x200, scoped, tag = 'input window, operand 2, single buffered']
    #allocation6 [shape = 's32[1]{0}', space=sflag, size = 0x4, scoped, tag = 'scoped memory for cnn_light_forward.1']
    #allocation7 [shape = 'u8[2048]{0}', space=smem, size = 0x800, scoped, tag = 'input window, operand 3, single buffered']
    #allocation8 [shape = 'u8[512]{0}', space=smem, size = 0x200, scoped, tag = 'input window, operand 4, single buffered']
    #allocation9 [shape = 's32[1]{0}', space=sflag, size = 0x4, scoped, tag = 'scoped memory for cnn_light_forward.1']
    %18 = vsyncpa [#allocation4], 0
    %19 = vsyncpa [#allocation6], 0
    %20 = vsyncpa [#allocation9], 0
    // Predicated region
    $region2: #{cnn_light_forward.1} parent=1 // pred_check
      _
    $region3: #{cnn_light_forward.1} parent=1 // pred_check_branch
      %22 = sbr.rel (0) target = $region5
    $region4: #{cnn_light_forward.1} parent=1 // pred_region
      _
    $region5: #{cnn_light_forward.1} parent=1 // pred_fallthru
      _
    // Predicated region
    $region6: #{cnn_light_forward.1} parent=1 // pred_check
      _
    $region7: #{cnn_light_forward.1} parent=1 // pred_check_branch
      %24 = sbr.rel (0) target = $region9
    $region8: #{cnn_light_forward.1} parent=1 // pred_region
      %s26 = ssub.s32 64, 64
      %27 = vsyncadd [#allocation4], %s26
      %s29 = sshll.u32 %s1, 4
      %s30 = int_to_ptr.vmem [resolvable:$true] %s29
      %32 = dma.vmem_to_smem %s30, 64, [#allocation3], [#allocation4]
    $region9: #{cnn_light_forward.1} parent=1 // pred_fallthru
      _
    // Predicated region
    $region10: #{cnn_light_forward.1} parent=1 // pred_check
      _
    $region11: #{cnn_light_forward.1} parent=1 // pred_check_branch
      %34 = sbr.rel (0) target = $region13
    $region12: #{cnn_light_forward.1} parent=1 // pred_region
      %s36 = ssub.s32 16, 16
      %37 = vsyncadd [#allocation6], %s36
      %s39 = sshll.u32 %s2, 4
      %s40 = int_to_ptr.vmem [resolvable:$true] %s39
      %42 = dma.vmem_to_smem %s40, 16, [#allocation5], [#allocation6]
    $region13: #{cnn_light_forward.1} parent=1 // pred_fallthru
      _
    // Predicated region
    $region14: #{cnn_light_forward.1} parent=1 // pred_check
      _
    $region15: #{cnn_light_forward.1} parent=1 // pred_check_branch
      %44 = sbr.rel (0) target = $region17
    $region16: #{cnn_light_forward.1} parent=1 // pred_region
      %s46 = ssub.s32 64, 64
      %47 = vsyncadd [#allocation6], %s46
      %s49 = sshll.u32 %s3, 4
      %s50 = int_to_ptr.vmem [resolvable:$true] %s49
      %52 = dma.vmem_to_smem %s50, 64, [#allocation7], [#allocation6]
    $region17: #{cnn_light_forward.1} parent=1 // pred_fallthru
      _
    // Predicated region
    $region18: #{cnn_light_forward.1} parent=1 // pred_check
      _
    $region19: #{cnn_light_forward.1} parent=1 // pred_check_branch
      %54 = sbr.rel (0) target = $region21
    $region20: #{cnn_light_forward.1} parent=1 // pred_region
      %s56 = ssub.s32 16, 16
      %57 = vsyncadd [#allocation9], %s56
      %s59 = sshll.u32 %s4, 4
      %s60 = int_to_ptr.vmem [resolvable:$true] %s59
      %62 = dma.vmem_to_smem %s60, 16, [#allocation8], [#allocation9]
    $region21: #{cnn_light_forward.1} parent=1 // pred_fallthru
      _
    // Predicated region
    $region22: #{cnn_light_forward.1} parent=1 // pred_check
      _
    $region23: #{cnn_light_forward.1} parent=1 // pred_check_branch
      %64 = sbr.rel (0) target = $region25
    $region24: #{cnn_light_forward.1} parent=1 // pred_region
      _
    $region25: #{cnn_light_forward.1} parent=1 // pred_fallthru
      _
    // Predicated region
    $region26: #{cnn_light_forward.1} parent=1 // pred_check
      _
    $region27: #{cnn_light_forward.1} parent=1 // pred_check_branch
      %66 = sbr.rel (0) target = $region29
    $region28: #{cnn_light_forward.1} parent=1 // pred_region
      _
    $region29: #{cnn_light_forward.1} parent=1 // pred_fallthru
      _
    // Predicated region
    $region30: #{cnn_light_forward.1} parent=1 // pred_check
      _
    $region31: #{cnn_light_forward.1} parent=1 // pred_check_branch
      %68 = sbr.rel (0) target = $region33
    $region32: #{cnn_light_forward.1} parent=1 // pred_region
      _
    $region33: #{cnn_light_forward.1} parent=1 // pred_fallthru
      _
    // Predicated region
    $region34: #{cnn_light_forward.1} parent=1 // pred_check
      _
    $region35: #{cnn_light_forward.1} parent=1 // pred_check_branch
      %70 = sbr.rel (0) target = $region37
    $region36: #{cnn_light_forward.1} parent=1 // pred_region
      _
    $region37: #{cnn_light_forward.1} parent=1 // pred_fallthru
      _
    // Predicated region
    $region38: #{cnn_light_forward.1} parent=1 // pred_check
      _
    $region39: #{cnn_light_forward.1} parent=1 // pred_check_branch
      %72 = sbr.rel (0) target = $region41
    $region40: #{cnn_light_forward.1} parent=1 // pred_region
      _
    $region41: #{cnn_light_forward.1} parent=1 // pred_fallthru
      _
    // Predicated region
    $region42: #{cnn_light_forward.1} parent=1 // pred_check
      _
    $region43: #{cnn_light_forward.1} parent=1 // pred_check_branch
      %74 = sbr.rel (0) target = $region45
    $region44: #{cnn_light_forward.1} parent=1 // pred_region
      _
    $region45: #{cnn_light_forward.1} parent=1 // pred_fallthru
      _
    // Predicated region
    $region46: #{cnn_light_forward.1} parent=1 // pred_check
      _
    $region47: #{cnn_light_forward.1} parent=1 // pred_check_branch
      %76 = sbr.rel (0) target = $region49
    $region48: #{cnn_light_forward.1} parent=1 // pred_region
      %77 = dma.done [#allocation4], 64
    $region49: #{cnn_light_forward.1} parent=1 // pred_fallthru
      _
    // Predicated region
    $region50: #{cnn_light_forward.1} parent=1 // pred_check
      _
    $region51: #{cnn_light_forward.1} parent=1 // pred_check_branch
      %79 = sbr.rel (0) target = $region53
    $region52: #{cnn_light_forward.1} parent=1 // pred_region
      %80 = dma.done [#allocation6], 16
    $region53: #{cnn_light_forward.1} parent=1 // pred_fallthru
      _
    // Predicated region
    $region54: #{cnn_light_forward.1} parent=1 // pred_check
      _
    $region55: #{cnn_light_forward.1} parent=1 // pred_check_branch
      %82 = sbr.rel (0) target = $region57
    $region56: #{cnn_light_forward.1} parent=1 // pred_region
      %83 = dma.done [#allocation6], 64
    $region57: #{cnn_light_forward.1} parent=1 // pred_fallthru
      _
    // Predicated region
    $region58: #{cnn_light_forward.1} parent=1 // pred_check
      _
    $region59: #{cnn_light_forward.1} parent=1 // pred_check_branch
      %85 = sbr.rel (0) target = $region61
    $region60: #{cnn_light_forward.1} parent=1 // pred_region
      %86 = dma.done [#allocation9], 16
    $region61: #{cnn_light_forward.1} parent=1 // pred_fallthru
      _
    %87 = sfence
    %v88 = vld [vmem:[%s0] sm:$0x3]
    %90 = vrot.lane.b32.xlu0 %v88, 3
    %v91 = vpop.permute.xlu0 %90
    %vm93 = vcmask 23552
    %v94 = vsel %vm93, 0.0, %v91
    %vm95 = vcmask 154624
    %v96 = vsel %vm95, %v94, 0.0
    %s97 = sld [smem:[#allocation5]]
    %v98 = vstv %s97
    %s99 = sld [smem:[#allocation3]]
    %v100 = vstv %s99
    %v101 = vmul.f32 %v100, %v96
    %v102 = vadd.f32 %v98, %v101
    %s103 = sld [smem:[#allocation3 + $0x1]]
    %v104 = vstv %s103
    %v105 = vmul.f32 %v104, %v96
    %107 = vrot.lane.b32.xlu0 %v105, 127
    %v108 = vpop.permute.xlu0 %107
    %v110 = vadd.f32 %v102, %v108
    %s111 = sld [smem:[#allocation3 + $0x2]]
    %v112 = vstv %s111
    %v113 = vmul.f32 %v112, %v96
    %115 = vrot.lane.b32.xlu0 %v113, 126
    %v116 = vpop.permute.xlu0 %115
    %v118 = vadd.f32 %v110, %v116
    %s119 = sld [smem:[#allocation3 + $0x3]]
    %v120 = vstv %s119
    %v121 = vmul.f32 %v120, %v96
    %123 = vrot.lane.b32.xlu0 %v121, 125
    %v124 = vpop.permute.xlu0 %123
    %v126 = vadd.f32 %v118, %v124
    %s127 = sld [smem:[#allocation3 + $0x4]]
    %v128 = vstv %s127
    %v129 = vmul.f32 %v128, %v96
    %131 = vrot.lane.b32.xlu0 %v129, 124
    %v132 = vpop.permute.xlu0 %131
    %v134 = vadd.f32 %v126, %v132
    %s135 = sld [smem:[#allocation3 + $0x5]]
    %v136 = vstv %s135
    %v137 = vmul.f32 %v136, %v96
    %139 = vrot.lane.b32.xlu0 %v137, 123
    %v140 = vpop.permute.xlu0 %139
    %v142 = vadd.f32 %v134, %v140
    %s143 = sld [smem:[#allocation3 + $0x6]]
    %v144 = vstv %s143
    %v145 = vmul.f32 %v144, %v96
    %147 = vrot.lane.b32.xlu0 %v145, 122
    %v148 = vpop.permute.xlu0 %147
    %v150 = vadd.f32 %v142, %v148
    %v151 = vmax.f32 %v150, 0.0
    %153 = vrot.lane.b32.xlu0 %v151, 127
    %v154 = vpop.permute.xlu0 %153
    %156 = vrot.lane.b32.xlu0 %v151, 15
    %v157 = vpop.permute.xlu0 %156
    %vm159 = vcmask 121856
    %v160 = vsel %vm159, %v154, %v157
    %v161 = vmax.f32 %v151, %v160
    %s162 = sld [smem:[#allocation5 + $0x1]]
    %v163 = vstv %s162
    %s164 = sld [smem:[#allocation3 + $0x80]]
    %v165 = vstv %s164
    %v166 = vmul.f32 %v165, %v96
    %v167 = vadd.f32 %v163, %v166
    %s168 = sld [smem:[#allocation3 + $0x81]]
    %v169 = vstv %s168
    %v170 = vmul.f32 %v169, %v96
    %172 = vrot.lane.b32.xlu0 %v170, 127
    %v173 = vpop.permute.xlu0 %172
    %v175 = vadd.f32 %v167, %v173
    %s176 = sld [smem:[#allocation3 + $0x82]]
    %v177 = vstv %s176
    %v178 = vmul.f32 %v177, %v96
    %180 = vrot.lane.b32.xlu0 %v178, 126
    %v181 = vpop.permute.xlu0 %180
    %v183 = vadd.f32 %v175, %v181
    %s184 = sld [smem:[#allocation3 + $0x83]]
    %v185 = vstv %s184
    %v186 = vmul.f32 %v185, %v96
    %188 = vrot.lane.b32.xlu0 %v186, 125
    %v189 = vpop.permute.xlu0 %188
    %v191 = vadd.f32 %v183, %v189
    %s192 = sld [smem:[#allocation3 + $0x84]]
    %v193 = vstv %s192
    %v194 = vmul.f32 %v193, %v96
    %196 = vrot.lane.b32.xlu0 %v194, 124
    %v197 = vpop.permute.xlu0 %196
    %v199 = vadd.f32 %v191, %v197
    %s200 = sld [smem:[#allocation3 + $0x85]]
    %v201 = vstv %s200
    %v202 = vmul.f32 %v201, %v96
    %204 = vrot.lane.b32.xlu0 %v202, 123
    %v205 = vpop.permute.xlu0 %204
    %v207 = vadd.f32 %v199, %v205
    %s208 = sld [smem:[#allocation3 + $0x86]]
    %v209 = vstv %s208
    %v210 = vmul.f32 %v209, %v96
    %212 = vrot.lane.b32.xlu0 %v210, 122
    %v213 = vpop.permute.xlu0 %212
    %v215 = vadd.f32 %v207, %v213
    %v216 = vmax.f32 %v215, 0.0
    %218 = vrot.lane.b32.xlu0 %v216, 127
    %v219 = vpop.permute.xlu0 %218
    %221 = vrot.lane.b32.xlu0 %v216, 15
    %v222 = vpop.permute.xlu0 %221
    %v224 = vsel %vm159, %v219, %v222
    %v225 = vmax.f32 %v216, %v224
    %s226 = sld [smem:[#allocation5 + $0x2]]
    %v227 = vstv %s226
    %s228 = sld [smem:[#allocation3 + $0x100]]
    %v229 = vstv %s228
    %v230 = vmul.f32 %v229, %v96
    %v231 = vadd.f32 %v227, %v230
    %s232 = sld [smem:[#allocation3 + $0x101]]
    %v233 = vstv %s232
    %v234 = vmul.f32 %v233, %v96
    %236 = vrot.lane.b32.xlu0 %v234, 127
    %v237 = vpop.permute.xlu0 %236
    %v239 = vadd.f32 %v231, %v237
    %s240 = sld [smem:[#allocation3 + $0x102]]
    %v241 = vstv %s240
    %v242 = vmul.f32 %v241, %v96
    %244 = vrot.lane.b32.xlu0 %v242, 126
    %v245 = vpop.permute.xlu0 %244
    %v247 = vadd.f32 %v239, %v245
    %s248 = sld [smem:[#allocation3 + $0x103]]
    %v249 = vstv %s248
    %v250 = vmul.f32 %v249, %v96
    %252 = vrot.lane.b32.xlu0 %v250, 125
    %v253 = vpop.permute.xlu0 %252
    %v255 = vadd.f32 %v247, %v253
    %s256 = sld [smem:[#allocation3 + $0x104]]
    %v257 = vstv %s256
    %v258 = vmul.f32 %v257, %v96
    %260 = vrot.lane.b32.xlu0 %v258, 124
    %v261 = vpop.permute.xlu0 %260
    %v263 = vadd.f32 %v255, %v261
    %s264 = sld [smem:[#allocation3 + $0x105]]
    %v265 = vstv %s264
    %v266 = vmul.f32 %v265, %v96
    %268 = vrot.lane.b32.xlu0 %v266, 123
    %v269 = vpop.permute.xlu0 %268
    %v271 = vadd.f32 %v263, %v269
    %s272 = sld [smem:[#allocation3 + $0x106]]
    %v273 = vstv %s272
    %v274 = vmul.f32 %v273, %v96
    %276 = vrot.lane.b32.xlu0 %v274, 122
    %v277 = vpop.permute.xlu0 %276
    %v279 = vadd.f32 %v271, %v277
    %v280 = vmax.f32 %v279, 0.0
    %282 = vrot.lane.b32.xlu0 %v280, 127
    %v283 = vpop.permute.xlu0 %282
    %285 = vrot.lane.b32.xlu0 %v280, 15
    %v286 = vpop.permute.xlu0 %285
    %v288 = vsel %vm159, %v283, %v286
    %v289 = vmax.f32 %v280, %v288
    %s290 = sld [smem:[#allocation5 + $0x3]]
    %v291 = vstv %s290
    %s292 = sld [smem:[#allocation3 + $0x180]]
    %v293 = vstv %s292
    %v294 = vmul.f32 %v293, %v96
    %v295 = vadd.f32 %v291, %v294
    %s296 = sld [smem:[#allocation3 + $0x181]]
    %v297 = vstv %s296
    %v298 = vmul.f32 %v297, %v96
    %300 = vrot.lane.b32.xlu0 %v298, 127
    %v301 = vpop.permute.xlu0 %300
    %v303 = vadd.f32 %v295, %v301
    %s304 = sld [smem:[#allocation3 + $0x182]]
    %v305 = vstv %s304
    %v306 = vmul.f32 %v305, %v96
    %308 = vrot.lane.b32.xlu0 %v306, 126
    %v309 = vpop.permute.xlu0 %308
    %v311 = vadd.f32 %v303, %v309
    %s312 = sld [smem:[#allocation3 + $0x183]]
    %v313 = vstv %s312
    %v314 = vmul.f32 %v313, %v96
    %316 = vrot.lane.b32.xlu0 %v314, 125
    %v317 = vpop.permute.xlu0 %316
    %v319 = vadd.f32 %v311, %v317
    %s320 = sld [smem:[#allocation3 + $0x184]]
    %v321 = vstv %s320
    %v322 = vmul.f32 %v321, %v96
    %324 = vrot.lane.b32.xlu0 %v322, 124
    %v325 = vpop.permute.xlu0 %324
    %v327 = vadd.f32 %v319, %v325
    %s328 = sld [smem:[#allocation3 + $0x185]]
    %v329 = vstv %s328
    %v330 = vmul.f32 %v329, %v96
    %332 = vrot.lane.b32.xlu0 %v330, 123
    %v333 = vpop.permute.xlu0 %332
    %v335 = vadd.f32 %v327, %v333
    %s336 = sld [smem:[#allocation3 + $0x186]]
    %v337 = vstv %s336
    %v338 = vmul.f32 %v337, %v96
    %340 = vrot.lane.b32.xlu0 %v338, 122
    %v341 = vpop.permute.xlu0 %340
    %v343 = vadd.f32 %v335, %v341
    %v344 = vmax.f32 %v343, 0.0
    %346 = vrot.lane.b32.xlu0 %v344, 127
    %v347 = vpop.permute.xlu0 %346
    %349 = vrot.lane.b32.xlu0 %v344, 15
    %v350 = vpop.permute.xlu0 %349
    %v352 = vsel %vm159, %v347, %v350
    %v353 = vmax.f32 %v344, %v352
    %355 = vrot.lane.b32.xlu0 %v161, 2
    %v356 = vpop.permute.xlu0 %355
    %vm358 = vcmask 15360
    %v359 = vsel %vm358, 0.0, %v356
    %vm360 = vcmask 146432
    %v361 = vsel %vm360, %v359, 0.0
    %363 = vrot.lane.b32.xlu0 %v225, 2
    %v364 = vpop.permute.xlu0 %363
    %v366 = vsel %vm358, 0.0, %v364
    %v367 = vsel %vm360, %v366, 0.0
    %369 = vrot.lane.b32.xlu0 %v289, 2
    %v370 = vpop.permute.xlu0 %369
    %v372 = vsel %vm358, 0.0, %v370
    %v373 = vsel %vm360, %v372, 0.0
    %375 = vrot.lane.b32.xlu0 %v353, 2
    %v376 = vpop.permute.xlu0 %375
    %v378 = vsel %vm358, 0.0, %v376
    %v379 = vsel %vm360, %v378, 0.0
    %s380 = sld [smem:[#allocation8]]
    %v381 = vstv %s380
    %s382 = sld [smem:[#allocation7]]
    %v383 = vstv %s382
    %v384 = vmul.f32 %v383, %v361
    %v385 = vadd.f32 %v381, %v384
    %s386 = sld [smem:[#allocation7 + $0x1]]
    %v387 = vstv %s386
    %v388 = vmul.f32 %v387, %v361
    %390 = vrot.lane.b32.xlu0 %v388, 126
    %v391 = vpop.permute.xlu0 %390
    %v393 = vadd.f32 %v385, %v391
    %s394 = sld [smem:[#allocation7 + $0x2]]
    %v395 = vstv %s394
    %v396 = vmul.f32 %v395, %v361
    %398 = vrot.lane.b32.xlu0 %v396, 124
    %v399 = vpop.permute.xlu0 %398
    %v401 = vadd.f32 %v393, %v399
    %s402 = sld [smem:[#allocation7 + $0x3]]
    %v403 = vstv %s402
    %v404 = vmul.f32 %v403, %v367
    %v405 = vadd.f32 %v401, %v404
    %s406 = sld [smem:[#allocation7 + $0x4]]
    %v407 = vstv %s406
    %v408 = vmul.f32 %v407, %v367
    %410 = vrot.lane.b32.xlu0 %v408, 126
    %v411 = vpop.permute.xlu0 %410
    %v413 = vadd.f32 %v405, %v411
    %s414 = sld [smem:[#allocation7 + $0x5]]
    %v415 = vstv %s414
    %v416 = vmul.f32 %v415, %v367
    %418 = vrot.lane.b32.xlu0 %v416, 124
    %v419 = vpop.permute.xlu0 %418
    %v421 = vadd.f32 %v413, %v419
    %s422 = sld [smem:[#allocation7 + $0x6]]
    %v423 = vstv %s422
    %v424 = vmul.f32 %v423, %v373
    %v425 = vadd.f32 %v421, %v424
    %s426 = sld [smem:[#allocation7 + $0x7]]
    %v427 = vstv %s426
    %v428 = vmul.f32 %v427, %v373
    %430 = vrot.lane.b32.xlu0 %v428, 126
    %v431 = vpop.permute.xlu0 %430
    %v433 = vadd.f32 %v425, %v431
    %s434 = sld [smem:[#allocation7 + $0x8]]
    %v435 = vstv %s434
    %v436 = vmul.f32 %v435, %v373
    %438 = vrot.lane.b32.xlu0 %v436, 124
    %v439 = vpop.permute.xlu0 %438
    %v441 = vadd.f32 %v433, %v439
    %s442 = sld [smem:[#allocation7 + $0x9]]
    %v443 = vstv %s442
    %v444 = vmul.f32 %v443, %v379
    %v445 = vadd.f32 %v441, %v444
    %s446 = sld [smem:[#allocation7 + $0xa]]
    %v447 = vstv %s446
    %v448 = vmul.f32 %v447, %v379
    %450 = vrot.lane.b32.xlu0 %v448, 126
    %v451 = vpop.permute.xlu0 %450
    %v453 = vadd.f32 %v445, %v451
    %s454 = sld [smem:[#allocation7 + $0xb]]
    %v455 = vstv %s454
    %v456 = vmul.f32 %v455, %v379
    %458 = vrot.lane.b32.xlu0 %v456, 124
    %v459 = vpop.permute.xlu0 %458
    %v461 = vadd.f32 %v453, %v459
    %v462 = vmax.f32 %v461, 0.0
    %464 = vrot.lane.b32.xlu0 %v462, 126
    %v465 = vpop.permute.xlu0 %464
    %467 = vrot.lane.b32.xlu0 %v462, 14
    %v468 = vpop.permute.xlu0 %467
    %vm470 = vcmask 113664
    %v471 = vsel %vm470, %v465, %v468
    %v472 = vmax.f32 %v462, %v471
    %s473 = sld [smem:[#allocation8 + $0x1]]
    %v474 = vstv %s473
    %s475 = sld [smem:[#allocation7 + $0x80]]
    %v476 = vstv %s475
    %v477 = vmul.f32 %v476, %v361
    %v478 = vadd.f32 %v474, %v477
    %s479 = sld [smem:[#allocation7 + $0x81]]
    %v480 = vstv %s479
    %v481 = vmul.f32 %v480, %v361
    %483 = vrot.lane.b32.xlu0 %v481, 126
    %v484 = vpop.permute.xlu0 %483
    %v486 = vadd.f32 %v478, %v484
    %s487 = sld [smem:[#allocation7 + $0x82]]
    %v488 = vstv %s487
    %v489 = vmul.f32 %v488, %v361
    %491 = vrot.lane.b32.xlu0 %v489, 124
    %v492 = vpop.permute.xlu0 %491
    %v494 = vadd.f32 %v486, %v492
    %s495 = sld [smem:[#allocation7 + $0x83]]
    %v496 = vstv %s495
    %v497 = vmul.f32 %v496, %v367
    %v498 = vadd.f32 %v494, %v497
    %s499 = sld [smem:[#allocation7 + $0x84]]
    %v500 = vstv %s499
    %v501 = vmul.f32 %v500, %v367
    %503 = vrot.lane.b32.xlu0 %v501, 126
    %v504 = vpop.permute.xlu0 %503
    %v506 = vadd.f32 %v498, %v504
    %s507 = sld [smem:[#allocation7 + $0x85]]
    %v508 = vstv %s507
    %v509 = vmul.f32 %v508, %v367
    %511 = vrot.lane.b32.xlu0 %v509, 124
    %v512 = vpop.permute.xlu0 %511
    %v514 = vadd.f32 %v506, %v512
    %s515 = sld [smem:[#allocation7 + $0x86]]
    %v516 = vstv %s515
    %v517 = vmul.f32 %v516, %v373
    %v518 = vadd.f32 %v514, %v517
    %s519 = sld [smem:[#allocation7 + $0x87]]
    %v520 = vstv %s519
    %v521 = vmul.f32 %v520, %v373
    %523 = vrot.lane.b32.xlu0 %v521, 126
    %v524 = vpop.permute.xlu0 %523
    %v526 = vadd.f32 %v518, %v524
    %s527 = sld [smem:[#allocation7 + $0x88]]
    %v528 = vstv %s527
    %v529 = vmul.f32 %v528, %v373
    %531 = vrot.lane.b32.xlu0 %v529, 124
    %v532 = vpop.permute.xlu0 %531
    %v534 = vadd.f32 %v526, %v532
    %s535 = sld [smem:[#allocation7 + $0x89]]
    %v536 = vstv %s535
    %v537 = vmul.f32 %v536, %v379
    %v538 = vadd.f32 %v534, %v537
    %s539 = sld [smem:[#allocation7 + $0x8a]]
    %v540 = vstv %s539
    %v541 = vmul.f32 %v540, %v379
    %543 = vrot.lane.b32.xlu0 %v541, 126
    %v544 = vpop.permute.xlu0 %543
    %v546 = vadd.f32 %v538, %v544
    %s547 = sld [smem:[#allocation7 + $0x8b]]
    %v548 = vstv %s547
    %v549 = vmul.f32 %v548, %v379
    %551 = vrot.lane.b32.xlu0 %v549, 124
    %v552 = vpop.permute.xlu0 %551
    %v554 = vadd.f32 %v546, %v552
    %v555 = vmax.f32 %v554, 0.0
    %557 = vrot.lane.b32.xlu0 %v555, 126
    %v558 = vpop.permute.xlu0 %557
    %560 = vrot.lane.b32.xlu0 %v555, 14
    %v561 = vpop.permute.xlu0 %560
    %v563 = vsel %vm470, %v558, %v561
    %v564 = vmax.f32 %v555, %v563
    %s565 = sld [smem:[#allocation8 + $0x2]]
    %v566 = vstv %s565
    %s567 = sld [smem:[#allocation7 + $0x100]]
    %v568 = vstv %s567
    %v569 = vmul.f32 %v568, %v361
    %v570 = vadd.f32 %v566, %v569
    %s571 = sld [smem:[#allocation7 + $0x101]]
    %v572 = vstv %s571
    %v573 = vmul.f32 %v572, %v361
    %575 = vrot.lane.b32.xlu0 %v573, 126
    %v576 = vpop.permute.xlu0 %575
    %v578 = vadd.f32 %v570, %v576
    %s579 = sld [smem:[#allocation7 + $0x102]]
    %v580 = vstv %s579
    %v581 = vmul.f32 %v580, %v361
    %583 = vrot.lane.b32.xlu0 %v581, 124
    %v584 = vpop.permute.xlu0 %583
    %v586 = vadd.f32 %v578, %v584
    %s587 = sld [smem:[#allocation7 + $0x103]]
    %v588 = vstv %s587
    %v589 = vmul.f32 %v588, %v367
    %v590 = vadd.f32 %v586, %v589
    %s591 = sld [smem:[#allocation7 + $0x104]]
    %v592 = vstv %s591
    %v593 = vmul.f32 %v592, %v367
    %595 = vrot.lane.b32.xlu0 %v593, 126
    %v596 = vpop.permute.xlu0 %595
    %v598 = vadd.f32 %v590, %v596
    %s599 = sld [smem:[#allocation7 + $0x105]]
    %v600 = vstv %s599
    %v601 = vmul.f32 %v600, %v367
    %603 = vrot.lane.b32.xlu0 %v601, 124
    %v604 = vpop.permute.xlu0 %603
    %v606 = vadd.f32 %v598, %v604
    %s607 = sld [smem:[#allocation7 + $0x106]]
    %v608 = vstv %s607
    %v609 = vmul.f32 %v608, %v373
    %v610 = vadd.f32 %v606, %v609
    %s611 = sld [smem:[#allocation7 + $0x107]]
    %v612 = vstv %s611
    %v613 = vmul.f32 %v612, %v373
    %615 = vrot.lane.b32.xlu0 %v613, 126
    %v616 = vpop.permute.xlu0 %615
    %v618 = vadd.f32 %v610, %v616
    %s619 = sld [smem:[#allocation7 + $0x108]]
    %v620 = vstv %s619
    %v621 = vmul.f32 %v620, %v373
    %623 = vrot.lane.b32.xlu0 %v621, 124
    %v624 = vpop.permute.xlu0 %623
    %v626 = vadd.f32 %v618, %v624
    %s627 = sld [smem:[#allocation7 + $0x109]]
    %v628 = vstv %s627
    %v629 = vmul.f32 %v628, %v379
    %v630 = vadd.f32 %v626, %v629
    %s631 = sld [smem:[#allocation7 + $0x10a]]
    %v632 = vstv %s631
    %v633 = vmul.f32 %v632, %v379
    %635 = vrot.lane.b32.xlu0 %v633, 126
    %v636 = vpop.permute.xlu0 %635
    %v638 = vadd.f32 %v630, %v636
    %s639 = sld [smem:[#allocation7 + $0x10b]]
    %v640 = vstv %s639
    %v641 = vmul.f32 %v640, %v379
    %643 = vrot.lane.b32.xlu0 %v641, 124
    %v644 = vpop.permute.xlu0 %643
    %v646 = vadd.f32 %v638, %v644
    %v647 = vmax.f32 %v646, 0.0
    %649 = vrot.lane.b32.xlu0 %v647, 126
    %v650 = vpop.permute.xlu0 %649
    %652 = vrot.lane.b32.xlu0 %v647, 14
    %v653 = vpop.permute.xlu0 %652
    %v655 = vsel %vm470, %v650, %v653
    %v656 = vmax.f32 %v647, %v655
    %s657 = sld [smem:[#allocation8 + $0x3]]
    %v658 = vstv %s657
    %s659 = sld [smem:[#allocation7 + $0x180]]
    %v660 = vstv %s659
    %v661 = vmul.f32 %v660, %v361
    %v662 = vadd.f32 %v658, %v661
    %s663 = sld [smem:[#allocation7 + $0x181]]
    %v664 = vstv %s663
    %v665 = vmul.f32 %v664, %v361
    %667 = vrot.lane.b32.xlu0 %v665, 126
    %v668 = vpop.permute.xlu0 %667
    %v670 = vadd.f32 %v662, %v668
    %s671 = sld [smem:[#allocation7 + $0x182]]
    %v672 = vstv %s671
    %v673 = vmul.f32 %v672, %v361
    %675 = vrot.lane.b32.xlu0 %v673, 124
    %v676 = vpop.permute.xlu0 %675
    %v678 = vadd.f32 %v670, %v676
    %s679 = sld [smem:[#allocation7 + $0x183]]
    %v680 = vstv %s679
    %v681 = vmul.f32 %v680, %v367
    %v682 = vadd.f32 %v678, %v681
    %s683 = sld [smem:[#allocation7 + $0x184]]
    %v684 = vstv %s683
    %v685 = vmul.f32 %v684, %v367
    %687 = vrot.lane.b32.xlu0 %v685, 126
    %v688 = vpop.permute.xlu0 %687
    %v690 = vadd.f32 %v682, %v688
    %s691 = sld [smem:[#allocation7 + $0x185]]
    %v692 = vstv %s691
    %v693 = vmul.f32 %v692, %v367
    %695 = vrot.lane.b32.xlu0 %v693, 124
    %v696 = vpop.permute.xlu0 %695
    %v698 = vadd.f32 %v690, %v696
    %s699 = sld [smem:[#allocation7 + $0x186]]
    %v700 = vstv %s699
    %v701 = vmul.f32 %v700, %v373
    %v702 = vadd.f32 %v698, %v701
    %s703 = sld [smem:[#allocation7 + $0x187]]
    %v704 = vstv %s703
    %v705 = vmul.f32 %v704, %v373
    %707 = vrot.lane.b32.xlu0 %v705, 126
    %v708 = vpop.permute.xlu0 %707
    %v710 = vadd.f32 %v702, %v708
    %s711 = sld [smem:[#allocation7 + $0x188]]
    %v712 = vstv %s711
    %v713 = vmul.f32 %v712, %v373
    %715 = vrot.lane.b32.xlu0 %v713, 124
    %v716 = vpop.permute.xlu0 %715
    %v718 = vadd.f32 %v710, %v716
    %s719 = sld [smem:[#allocation7 + $0x189]]
    %v720 = vstv %s719
    %v721 = vmul.f32 %v720, %v379
    %v722 = vadd.f32 %v718, %v721
    %s723 = sld [smem:[#allocation7 + $0x18a]]
    %v724 = vstv %s723
    %v725 = vmul.f32 %v724, %v379
    %727 = vrot.lane.b32.xlu0 %v725, 126
    %v728 = vpop.permute.xlu0 %727
    %v730 = vadd.f32 %v722, %v728
    %s731 = sld [smem:[#allocation7 + $0x18b]]
    %v732 = vstv %s731
    %v733 = vmul.f32 %v732, %v379
    %735 = vrot.lane.b32.xlu0 %v733, 124
    %v736 = vpop.permute.xlu0 %735
    %v738 = vadd.f32 %v730, %v736
    %v739 = vmax.f32 %v738, 0.0
    %741 = vrot.lane.b32.xlu0 %v739, 126
    %v742 = vpop.permute.xlu0 %741
    %744 = vrot.lane.b32.xlu0 %v739, 14
    %v745 = vpop.permute.xlu0 %744
    %v747 = vsel %vm470, %v742, %v745
    %v748 = vmax.f32 %v739, %v747
    %750 = vrot.lane.b32.xlu0 %v564, 16
    %v751 = vpop.permute.xlu0 %750
    %754 = vrot.lane.b32.xlu0 %v656, 32
    %v755 = vpop.permute.xlu0 %754
    %758 = vrot.lane.b32.xlu0 %v748, 48
    %v759 = vpop.permute.xlu0 %758
    %vm761 = vcmask 130048
    %v762 = vsel %vm761, %v472, %v751
    %vm763 = vcmask 261120
    %v764 = vsel %vm763, %v762, %v755
    %vm765 = vcmask 392192
    %v766 = vsel %vm765, %v764, %v759
    %v767 = vld [vmem:[%s5] sm:$0xff]
    %v768 = vld [vmem:[%s5 + $0x8] sm:$0xff]
    %v769 = vld [vmem:[%s5 + $0x10] sm:$0xff]
    %v770 = vld [vmem:[%s5 + $0x18] sm:$0xff]
    %v771 = vld [vmem:[%s5 + $0x20] sm:$0xff]
    %v772 = vld [vmem:[%s5 + $0x28] sm:$0xff]
    %v773 = vld [vmem:[%s5 + $0x30] sm:$0xff]
    %v774 = vld [vmem:[%s5 + $0x38] sm:$0xff]
    %v775 = vld [vmem:[%s6] sm:$0x1]
    %v777 = vlaneseq
    %v778 = vshrl.u32 %v777, 7
    %v779 = vsub.s32 0, %v778
    %v780 = vrot.slane %v775, %v779
    %vm782 = vcmask 523264
    %v784 = vsel %vm782, %v766, 0
    %786 = vmatprep.subr.mxu0 0.0
    %787 = vmatpush1.msra.mxu0 %v767
    %788 = vmatprep.subr.mxu0 0.0
    %789 = vmatpush1.msra.mxu0 %v768
    %790 = vmatprep.subr.mxu0 0.0
    %791 = vmatpush1.msra.mxu0 %v769
    %792 = vmatprep.subr.mxu0 0.0
    %793 = vmatpush1.msra.mxu0 %v770
    %794 = vmatprep.subr.mxu0 0.0
    %795 = vmatpush1.msra.mxu0 %v771
    %796 = vmatprep.subr.mxu0 0.0
    %797 = vmatpush1.msra.mxu0 %v772
    %798 = vmatprep.subr.mxu0 0.0
    %799 = vmatpush1.msra.mxu0 %v773
    %800 = vmatprep.subr.mxu0 0.0
    %801 = vmatpush1.msra.mxu0 %v774
    %802 = vmatprep.subr.mxu0 0.0
    %803 = vmatpush1.msra.mxu0 0.0
    %804 = vmatprep.subr.mxu0 0.0
    %805 = vmatpush1.msra.mxu0 0.0
    %806 = vmatprep.subr.mxu0 0.0
    %807 = vmatpush1.msra.mxu0 0.0
    %808 = vmatprep.subr.mxu0 0.0
    %809 = vmatpush1.msra.mxu0 0.0
    %810 = vmatprep.subr.mxu0 0.0
    %811 = vmatpush1.msra.mxu0 0.0
    %812 = vmatprep.subr.mxu0 0.0
    %813 = vmatpush1.msra.mxu0 0.0
    %814 = vmatprep.subr.mxu0 0.0
    %815 = vmatpush1.msra.mxu0 0.0
    %816 = vmatprep.subr.mxu0 0.0
    %817 = vmatpush1.msra.mxu0 0.0
    %818 = vmatprep.subr.mxu0 0.0
    %819 = vmatpush1.msra.mxu0 0.0
    %820 = vmatprep.subr.mxu0 0.0
    %821 = vmatpush1.msra.mxu0 0.0
    %822 = vmatprep.subr.mxu0 0.0
    %823 = vmatpush1.msra.mxu0 0.0
    %824 = vmatprep.subr.mxu0 0.0
    %825 = vmatpush1.msra.mxu0 0.0
    %826 = vmatprep.subr.mxu0 0.0
    %827 = vmatpush1.msra.mxu0 0.0
    %828 = vmatprep.subr.mxu0 0.0
    %829 = vmatpush1.msra.mxu0 0.0
    %830 = vmatprep.subr.mxu0 0.0
    %831 = vmatpush1.msra.mxu0 0.0
    %832 = vmatprep.subr.mxu0 0.0
    %833 = vmatpush1.msra.mxu0 0.0
    %834 = vmatprep.subr.mxu0 0.0
    %835 = vmatpush1.msra.mxu0 0.0
    %836 = vmatprep.subr.mxu0 0.0
    %837 = vmatpush1.msra.mxu0 0.0
    %838 = vmatprep.subr.mxu0 0.0
    %839 = vmatpush1.msra.mxu0 0.0
    %840 = vmatprep.subr.mxu0 0.0
    %841 = vmatpush1.msra.mxu0 0.0
    %842 = vmatprep.subr.mxu0 0.0
    %843 = vmatpush1.msra.mxu0 0.0
    %844 = vmatprep.subr.mxu0 0.0
    %845 = vmatpush1.msra.mxu0 0.0
    %846 = vmatprep.subr.mxu0 0.0
    %847 = vmatpush1.msra.mxu0 0.0
    %848 = vmatprep.subr.mxu0 0.0
    %849 = vmatpush1.msra.mxu0 0.0
    %850 = vmatprep.mubr.f32.mxu0 0.0
    %851 = vmatmul.mubr.f32.gmra.mrb[0].mxu0 %v784
    %v852 = vpop.f32.mrb[0].mxu0
    %v853 = vadd.f32 %v780, %v852
    %v854 = vpop.f32.mrb[0].mxu0
    %855 = vdwg.mxu0
    %v856 = vld [vmem:[%s7] sm:$0xff]
    %v857 = vld [vmem:[%s7 + $0x8] sm:$0xff]
    %v858 = vld [vmem:[%s7 + $0x10] sm:$0xff]
    %v859 = vld [vmem:[%s7 + $0x18] sm:$0xff]
    %v860 = vld [vmem:[%s8] sm:$0x1]
    %v862 = vlaneseq
    %v863 = vshrl.u32 %v862, 7
    %v864 = vsub.s32 0, %v863
    %v865 = vrot.slane %v860, %v864
    %v868 = vsel %vm763, %v853, 0
    %870 = vmatprep.subr.mxu0 0.0
    %871 = vmatpush1.msra.mxu0 %v856
    %872 = vmatprep.subr.mxu0 0.0
    %873 = vmatpush1.msra.mxu0 %v857
    %874 = vmatprep.subr.mxu0 0.0
    %875 = vmatpush1.msra.mxu0 %v858
    %876 = vmatprep.subr.mxu0 0.0
    %877 = vmatpush1.msra.mxu0 %v859
    %878 = vmatprep.subr.mxu0 0.0
    %879 = vmatpush1.msra.mxu0 0.0
    %880 = vmatprep.subr.mxu0 0.0
    %881 = vmatpush1.msra.mxu0 0.0
    %882 = vmatprep.subr.mxu0 0.0
    %883 = vmatpush1.msra.mxu0 0.0
    %884 = vmatprep.subr.mxu0 0.0
    %885 = vmatpush1.msra.mxu0 0.0
    %886 = vmatprep.subr.mxu0 0.0
    %887 = vmatpush1.msra.mxu0 0.0
    %888 = vmatprep.subr.mxu0 0.0
    %889 = vmatpush1.msra.mxu0 0.0
    %890 = vmatprep.subr.mxu0 0.0
    %891 = vmatpush1.msra.mxu0 0.0
    %892 = vmatprep.subr.mxu0 0.0
    %893 = vmatpush1.msra.mxu0 0.0
    %894 = vmatprep.subr.mxu0 0.0
    %895 = vmatpush1.msra.mxu0 0.0
    %896 = vmatprep.subr.mxu0 0.0
    %897 = vmatpush1.msra.mxu0 0.0
    %898 = vmatprep.subr.mxu0 0.0
    %899 = vmatpush1.msra.mxu0 0.0
    %900 = vmatprep.subr.mxu0 0.0
    %901 = vmatpush1.msra.mxu0 0.0
    %902 = vmatprep.subr.mxu0 0.0
    %903 = vmatpush1.msra.mxu0 0.0
    %904 = vmatprep.subr.mxu0 0.0
    %905 = vmatpush1.msra.mxu0 0.0
    %906 = vmatprep.subr.mxu0 0.0
    %907 = vmatpush1.msra.mxu0 0.0
    %908 = vmatprep.subr.mxu0 0.0
    %909 = vmatpush1.msra.mxu0 0.0
    %910 = vmatprep.subr.mxu0 0.0
    %911 = vmatpush1.msra.mxu0 0.0
    %912 = vmatprep.subr.mxu0 0.0
    %913 = vmatpush1.msra.mxu0 0.0
    %914 = vmatprep.subr.mxu0 0.0
    %915 = vmatpush1.msra.mxu0 0.0
    %916 = vmatprep.subr.mxu0 0.0
    %917 = vmatpush1.msra.mxu0 0.0
    %918 = vmatprep.subr.mxu0 0.0
    %919 = vmatpush1.msra.mxu0 0.0
    %920 = vmatprep.subr.mxu0 0.0
    %921 = vmatpush1.msra.mxu0 0.0
    %922 = vmatprep.subr.mxu0 0.0
    %923 = vmatpush1.msra.mxu0 0.0
    %924 = vmatprep.subr.mxu0 0.0
    %925 = vmatpush1.msra.mxu0 0.0
    %926 = vmatprep.subr.mxu0 0.0
    %927 = vmatpush1.msra.mxu0 0.0
    %928 = vmatprep.subr.mxu0 0.0
    %929 = vmatpush1.msra.mxu0 0.0
    %930 = vmatprep.subr.mxu0 0.0
    %931 = vmatpush1.msra.mxu0 0.0
    %932 = vmatprep.subr.mxu0 0.0
    %933 = vmatpush1.msra.mxu0 0.0
    %934 = vmatprep.mubr.f32.mxu0 0.0
    %935 = vmatmul.mubr.f32.gmra.mrb[0].mxu0 %v868
    %v936 = vpop.f32.mrb[0].mxu0
    %v937 = vadd.f32 %v865, %v936
    %v938 = vpop.f32.mrb[0].mxu0
    %939 = vdwg.mxu0
    %v940 = vld [vmem:[%s9] sm:$0xff]
    %v941 = vld [vmem:[%s9 + $0x8] sm:$0xff]
    %v942 = vld [vmem:[%s9 + $0x10] sm:$0xff]
    %v943 = vld [vmem:[%s9 + $0x18] sm:$0xff]
    %v944 = vld [vmem:[#allocation2] sm:$0x1]
    %v946 = vlaneseq
    %v947 = vshrl.u32 %v946, 7
    %v948 = vsub.s32 0, %v947
    %v949 = vrot.slane %v944, %v948
    %v952 = vsel %vm763, %v937, 0
    %954 = vmatprep.subr.mxu0 0.0
    %955 = vmatpush1.msra.mxu0 %v940
    %956 = vmatprep.subr.mxu0 0.0
    %957 = vmatpush1.msra.mxu0 %v941
    %958 = vmatprep.subr.mxu0 0.0
    %959 = vmatpush1.msra.mxu0 %v942
    %960 = vmatprep.subr.mxu0 0.0
    %961 = vmatpush1.msra.mxu0 %v943
    %962 = vmatprep.subr.mxu0 0.0
    %963 = vmatpush1.msra.mxu0 0.0
    %964 = vmatprep.subr.mxu0 0.0
    %965 = vmatpush1.msra.mxu0 0.0
    %966 = vmatprep.subr.mxu0 0.0
    %967 = vmatpush1.msra.mxu0 0.0
    %968 = vmatprep.subr.mxu0 0.0
    %969 = vmatpush1.msra.mxu0 0.0
    %970 = vmatprep.subr.mxu0 0.0
    %971 = vmatpush1.msra.mxu0 0.0
    %972 = vmatprep.subr.mxu0 0.0
    %973 = vmatpush1.msra.mxu0 0.0
    %974 = vmatprep.subr.mxu0 0.0
    %975 = vmatpush1.msra.mxu0 0.0
    %976 = vmatprep.subr.mxu0 0.0
    %977 = vmatpush1.msra.mxu0 0.0
    %978 = vmatprep.subr.mxu0 0.0
    %979 = vmatpush1.msra.mxu0 0.0
    %980 = vmatprep.subr.mxu0 0.0
    %981 = vmatpush1.msra.mxu0 0.0
    %982 = vmatprep.subr.mxu0 0.0
    %983 = vmatpush1.msra.mxu0 0.0
    %984 = vmatprep.subr.mxu0 0.0
    %985 = vmatpush1.msra.mxu0 0.0
    %986 = vmatprep.subr.mxu0 0.0
    %987 = vmatpush1.msra.mxu0 0.0
    %988 = vmatprep.subr.mxu0 0.0
    %989 = vmatpush1.msra.mxu0 0.0
    %990 = vmatprep.subr.mxu0 0.0
    %991 = vmatpush1.msra.mxu0 0.0
    %992 = vmatprep.subr.mxu0 0.0
    %993 = vmatpush1.msra.mxu0 0.0
    %994 = vmatprep.subr.mxu0 0.0
    %995 = vmatpush1.msra.mxu0 0.0
    %996 = vmatprep.subr.mxu0 0.0
    %997 = vmatpush1.msra.mxu0 0.0
    %998 = vmatprep.subr.mxu0 0.0
    %999 = vmatpush1.msra.mxu0 0.0
    %1000 = vmatprep.subr.mxu0 0.0
    %1001 = vmatpush1.msra.mxu0 0.0
    %1002 = vmatprep.subr.mxu0 0.0
    %1003 = vmatpush1.msra.mxu0 0.0
    %1004 = vmatprep.subr.mxu0 0.0
    %1005 = vmatpush1.msra.mxu0 0.0
    %1006 = vmatprep.subr.mxu0 0.0
    %1007 = vmatpush1.msra.mxu0 0.0
    %1008 = vmatprep.subr.mxu0 0.0
    %1009 = vmatpush1.msra.mxu0 0.0
    %1010 = vmatprep.subr.mxu0 0.0
    %1011 = vmatpush1.msra.mxu0 0.0
    %1012 = vmatprep.subr.mxu0 0.0
    %1013 = vmatpush1.msra.mxu0 0.0
    %1014 = vmatprep.subr.mxu0 0.0
    %1015 = vmatpush1.msra.mxu0 0.0
    %1016 = vmatprep.subr.mxu0 0.0
    %1017 = vmatpush1.msra.mxu0 0.0
    %1018 = vmatprep.mubr.f32.mxu0 0.0
    %1019 = vmatmul.mubr.f32.gmra.mrb[0].mxu0 %v952
    %v1020 = vpop.f32.mrb[0].mxu0
    %v1021 = vadd.f32 %v949, %v1020
    %v1022 = vpop.f32.mrb[0].mxu0
    %1023 = vdwg.mxu0
    %vm1024 = vcmask 1024
    %1025 = vst.msk [vmem:[%s11] sm:$0x3] %vm1024, %v1021
    // Predicated region
    $region62: #{cnn_light_forward.1} parent=1 // pred_check
      _
    $region63: #{cnn_light_forward.1} parent=1 // pred_check_branch
      %1027 = sbr.rel (0) target = $region65
    $region64: #{cnn_light_forward.1} parent=1 // pred_region
      _
    $region65: #{cnn_light_forward.1} parent=1 // pred_fallthru
      _
    // Predicated region
    $region66: #{cnn_light_forward.1} parent=1 // pred_check
      _
    $region67: #{cnn_light_forward.1} parent=1 // pred_check_branch
      %1029 = sbr.rel (0) target = $region69
    $region68: #{cnn_light_forward.1} parent=1 // pred_region
      _
    $region69: #{cnn_light_forward.1} parent=1 // pred_fallthru
      _
    %1030 = vsyncpa [#allocation4], 1
    %1031 = vsyncpa [#allocation6], 1
    %1032 = vsyncpa [#allocation9], 1

</llo_original>
